<compile_context>
chip_gen: v7x
topology: tpu7x:2x2x1
jax: 0.10.0
libtpu: 0.0.40
codegen_flags: <defaults>
</compile_context>

<pallas_src>
import functools
import math

import numpy as np
import jax
import jax.numpy as jnp
from jax.experimental import pallas as pl
from jax.experimental.pallas import tpu as pltpu

F32 = jnp.float32
VMEM_SPEC = pl.BlockSpec(memory_space=pltpu.MemorySpace.VMEM)


def _vmem_specs(n):
    return [VMEM_SPEC] * n


RELS = [
    ("road", "road2road", "road"),
    ("road", "road2cellular", "cellular"),
    ("cellular", "cellular2road", "road"),
    ("cellular", "cellular2cellular", "cellular"),
]


# --------------------------- fused RGCN kernel ------------------------------

def _rgcn_kernel(road_emb_ref, cell_emb_ref,
                 w7_ref, b7_ref, w8_ref, b8_ref,
                 a_road_ref, a_cell_ref,
                 w1_road_ref, w1_cell_ref, b1_road_ref, b1_cell_ref,
                 w2_road_ref, w2_cell_ref, b2_road_ref, b2_cell_ref,
                 road_out_ref, cell_out_ref, *, nhid):
    # linear7 / linear8 on the node embedding tables
    x_road = (jnp.dot(road_emb_ref[...], w7_ref[...],
                      preferred_element_type=jnp.float32) + b7_ref[...])
    x_cell = (jnp.dot(cell_emb_ref[...], w8_ref[...],
                      preferred_element_type=jnp.float32) + b8_ref[...])

    a_road = a_road_ref[...]        # (R, R+C)  [road-src cols | cellular-src cols]
    a_cell = a_cell_ref[...]        # (C, R+C)

    def hetero_layer(xr, xc, w_road_ref, w_cell_ref, b_road_ref, b_cell_ref):
        # per-src projection: one (N_src,128) x (128,256) matmul per src type
        xw_road = jnp.dot(xr, w_road_ref[...], preferred_element_type=jnp.float32)
        xw_cell = jnp.dot(xc, w_cell_ref[...], preferred_element_type=jnp.float32)
        # stack messages by src-node order matching the concatenated adjacency cols
        xw_dst_road = jnp.concatenate([xw_road[:, :nhid], xw_cell[:, :nhid]], axis=0)
        xw_dst_cell = jnp.concatenate([xw_road[:, nhid:], xw_cell[:, nhid:]], axis=0)
        h_road = (jnp.dot(a_road, xw_dst_road,
                          preferred_element_type=jnp.float32) + b_road_ref[...])
        h_cell = (jnp.dot(a_cell, xw_dst_cell,
                          preferred_element_type=jnp.float32) + b_cell_ref[...])
        return h_road, h_cell

    h_road, h_cell = hetero_layer(x_road, x_cell,
                                  w1_road_ref, w1_cell_ref, b1_road_ref, b1_cell_ref)
    h_road = jnp.maximum(h_road, 0.0)
    h_cell = jnp.maximum(h_cell, 0.0)
    h_road, h_cell = hetero_layer(h_road, h_cell,
                                  w2_road_ref, w2_cell_ref, b2_road_ref, b2_cell_ref)
    road_out_ref[...] = h_road
    cell_out_ref[...] = h_cell


def rgcn_pallas(prep):
    r = prep["road_emb"].shape[0]
    c = prep["cellular_emb"].shape[0]
    nhid = prep["w7"].shape[1]
    kern = functools.partial(_rgcn_kernel, nhid=nhid)
    return pl.pallas_call(
        kern,
        out_shape=(jax.ShapeDtypeStruct((r, nhid), F32),
                   jax.ShapeDtypeStruct((c, nhid), F32)),
        in_specs=_vmem_specs(16),
        out_specs=(VMEM_SPEC, VMEM_SPEC),
    )(prep["road_emb"], prep["cellular_emb"],
      prep["w7"], prep["b7"], prep["w8"], prep["b8"],
      prep["a_road"], prep["a_cell"],
      prep["rgcn_w1_road"], prep["rgcn_w1_cell"],
      prep["rgcn_b1_road"], prep["rgcn_b1_cell"],
      prep["rgcn_w2_road"], prep["rgcn_w2_cell"],
      prep["rgcn_b2_road"], prep["rgcn_b2_cell"])


# --------------------------- fused LSTM kernel ------------------------------

def _sigmoid(x):
    return 1.0 / (1.0 + jnp.exp(-x))


def _lstm_kernel(x_ref, m_ref, w_ref, b_ref, h_out_ref, *, seq_len, hid):
    bsz = x_ref.shape[1]
    h = jnp.zeros((bsz, hid), F32)
    c = jnp.zeros((bsz, hid), F32)
    w = w_ref[...]           # (2H, 4H) = [Wx ; Wh]
    bias = b_ref[...]        # (1, 4H)  = b_ih + b_hh
    for t in range(seq_len):                       # static trip count -> fully unrolled
        x_t = x_ref[t]                             # (B, H)
        m = m_ref[t]                               # (B, 1) validity mask
        gates = (jnp.dot(jnp.concatenate([x_t, h], axis=1), w,
                         preferred_element_type=jnp.float32) + bias)
        # PyTorch gate order: i, f, g, o
        i_g = _sigmoid(gates[:, 0 * hid:1 * hid])
        f_g = _sigmoid(gates[:, 1 * hid:2 * hid])
        g_g = jnp.tanh(gates[:, 2 * hid:3 * hid])
        o_g = _sigmoid(gates[:, 3 * hid:4 * hid])
        c_new = f_g * c + i_g * g_g
        h_new = o_g * jnp.tanh(c_new)
        h = m * h_new + (1.0 - m) * h
        c = m * c_new + (1.0 - m) * c
    h_out_ref[...] = h


def lstm_pallas(x_padded, mask, w_cat, b):
    seq_len, bsz, hid = x_padded.shape
    kern = functools.partial(_lstm_kernel, seq_len=seq_len, hid=hid)
    return pl.pallas_call(
        kern,
        out_shape=jax.ShapeDtypeStruct((bsz, hid), F32),
        in_specs=_vmem_specs(4),
        out_specs=VMEM_SPEC,
    )(x_padded, mask, w_cat, b)


# --------------------------- fused head kernel ------------------------------

def _head_kernel(cell_ref, path_ref,
                 w3c_ref, w3p_ref, b3_ref,
                 wt_ref, bt_ref, w6_ref, b6_ref, o_ref):
    # feature1 = relu(linear3(concat([cell_seq_embed (broadcast), path_embed])))
    #          = relu(cell @ W3_cell + path @ W3_path + b3)   (row-broadcast add)
    f1 = (jnp.dot(path_ref[...], w3p_ref[...], preferred_element_type=jnp.float32)
          + jnp.dot(cell_ref[...], w3c_ref[...], preferred_element_type=jnp.float32)
          + b3_ref[...])
    f1 = jnp.maximum(f1, 0.0)
    # dropout: identity (eval mode)
    h = (jnp.dot(f1, wt_ref[...], preferred_element_type=jnp.float32) + bt_ref[...])
    h = jnp.maximum(h, 0.0)
    logits = (jnp.dot(h, w6_ref[...], preferred_element_type=jnp.float32) + b6_ref[...])
    logits = logits - jnp.max(logits, axis=1, keepdims=True)
    e = jnp.exp(logits)
    o_ref[...] = e / jnp.sum(e, axis=1, keepdims=True)


def head_pallas(cell_seq_embed, path_embed, prep):
    bsz = path_embed.shape[0]
    return pl.pallas_call(
        _head_kernel,
        out_shape=jax.ShapeDtypeStruct((bsz, 2), F32),
        in_specs=_vmem_specs(9),
        out_specs=VMEM_SPEC,
    )(cell_seq_embed, path_embed,
      prep["w3_cell"], prep["w3_path"], prep["b3"],
      prep["wt"], prep["bt"], prep["w6"], prep["b6"])


# --------------------------- forward pass -----------------------------------

def trans_model_forward(prep, cellular1_id, cellular2_id, path_batch_data,
                        cellular_distance, path_distance):
    # distance inputs are unused by the reference output (dead feature2 branch);
    # kept in the signature for interface fidelity.
    del cellular_distance, path_distance

    road_embedding, cellular_embedding = rgcn_pallas(prep)

    # ---- path LSTM (lstm1) over variable-length road-id sequences ----------
    lengths = [len(p) for p in path_batch_data]
    max_len = max(lengths)
    bsz = len(path_batch_data)
    idx = np.zeros((max_len, bsz), np.int32)
    mask = np.zeros((max_len, bsz, 1), np.float32)
    for i, p in enumerate(path_batch_data):
        idx[:lengths[i], i] = np.asarray(p, np.int32)
        mask[:lengths[i], i, 0] = 1.0
    x_path = road_embedding[jnp.asarray(idx)]            # (T, B, H) single gather
    path_embed = lstm_pallas(x_path, jnp.asarray(mask),
                             prep["lstm1_w"], prep["lstm1_b"])

    # ---- 2-step cellular LSTM (lstm2), batch of one -------------------------
    cell_idx = jnp.asarray([[cellular1_id], [cellular2_id]], jnp.int32)   # (2, 1)
    x_cell = cellular_embedding[cell_idx]                # (2, 1, H)
    cell_mask = jnp.ones((2, 1, 1), F32)
    cellular_seq_embed = lstm_pallas(x_cell, cell_mask,
                                     prep["lstm2_w"], prep["lstm2_b"])    # (1, H)

    # ---- fused MLP head: linear3+relu -> linear_temp+relu -> linear6+softmax
    return head_pallas(cellular_seq_embed, path_embed, prep)


# --------------------------- parameter init / prep --------------------------

def init_params(key, nhid, gcn_nfeat, road_num_nodes, cellular_num_nodes):
    keys = iter(jax.random.split(key, 128))

    def uni(shape, fan_in):
        bound = 1.0 / math.sqrt(fan_in)
        return jax.random.uniform(next(keys), shape, F32, -bound, bound)

    def lin(in_f, out_f):
        return {"w": uni((in_f, out_f), in_f), "b": uni((out_f,), in_f)}

    params = {
        "road_emb": jax.random.normal(next(keys), (road_num_nodes, gcn_nfeat), F32),
        "cellular_emb": jax.random.normal(next(keys), (cellular_num_nodes, gcn_nfeat), F32),
        "linear3": lin(2 * nhid, nhid),
        "linear6": lin(nhid, 2),
        "linear7": lin(nhid, nhid),
        "linear8": lin(nhid, nhid),
        "linear_temp": lin(nhid, nhid),
    }

    rgcn = {}
    for (_, rel, _) in RELS:
        rgcn[rel] = {
            "w1": uni((gcn_nfeat, nhid), gcn_nfeat),
            "b1": jnp.zeros((nhid,), F32),
            "w2": uni((nhid, nhid), nhid),
            "b2": jnp.zeros((nhid,), F32),
        }
    params["rgcn"] = rgcn

    def lstm(in_f, hid):
        bound = 1.0 / math.sqrt(hid)
        return {
            "wx": jax.random.uniform(next(keys), (in_f, 4 * hid), F32, -bound, bound),
            "wh": jax.random.uniform(next(keys), (hid, 4 * hid), F32, -bound, bound),
            "b": jax.random.uniform(next(keys), (4 * hid,), F32, -bound, bound),  # b_ih+b_hh
        }

    params["lstm1"] = lstm(nhid, nhid)
    params["lstm2"] = lstm(nhid, nhid)
    return params


def make_graph(key, road_num_nodes, cellular_num_nodes):
    """Dense normalized adjacency per relation: A_norm = D_dst^-1/2 A D_src^-1/2."""
    sizes = {"road": road_num_nodes, "cellular": cellular_num_nodes}
    adj_norm = {}
    ks = jax.random.split(key, len(RELS))
    for k, (src, rel, dst) in zip(ks, RELS):
        a = jax.random.bernoulli(k, 0.3, (sizes[dst], sizes[src])).astype(F32)
        deg_dst = jnp.maximum(a.sum(axis=1, keepdims=True), 1.0)
        deg_src = jnp.maximum(a.sum(axis=0, keepdims=True), 1.0)
        adj_norm[rel] = a / jnp.sqrt(deg_dst) / jnp.sqrt(deg_src)
    return adj_norm


def prepare_params(params, adj_norm, nhid):
    """One-time layout prep: pre-cast, pre-reshape biases, pre-concat fused weights
    so no per-call astype / reshape / concat copies remain on the hot path."""
    rg = params["rgcn"]
    prep = {
        "road_emb": params["road_emb"],
        "cellular_emb": params["cellular_emb"],
        # linear7 / linear8
        "w7": params["linear7"]["w"], "b7": params["linear7"]["b"].reshape(1, -1),
        "w8": params["linear8"]["w"], "b8": params["linear8"]["b"].reshape(1, -1),
        # concatenated adjacency per dst:  [road-src cols | cellular-src cols]
        "a_road": jnp.concatenate([adj_norm["road2road"],
                                   adj_norm["cellular2road"]], axis=1),
        "a_cell": jnp.concatenate([adj_norm["road2cellular"],
                                   adj_norm["cellular2cellular"]], axis=1),
        # per-src relation-batched RGCN weights, K=128 / N=256 matmul shapes
        "rgcn_w1_road": jnp.concatenate([rg["road2road"]["w1"],
                                         rg["road2cellular"]["w1"]], axis=1),
        "rgcn_w1_cell": jnp.concatenate([rg["cellular2road"]["w1"],
                                         rg["cellular2cellular"]["w1"]], axis=1),
        "rgcn_b1_road": (rg["road2road"]["b1"] + rg["cellular2road"]["b1"]).reshape(1, -1),
        "rgcn_b1_cell": (rg["road2cellular"]["b1"]
                         + rg["cellular2cellular"]["b1"]).reshape(1, -1),
        "rgcn_w2_road": jnp.concatenate([rg["road2road"]["w2"],
                                         rg["road2cellular"]["w2"]], axis=1),
        "rgcn_w2_cell": jnp.concatenate([rg["cellular2road"]["w2"],
                                         rg["cellular2cellular"]["w2"]], axis=1),
        "rgcn_b2_road": (rg["road2road"]["b2"] + rg["cellular2road"]["b2"]).reshape(1, -1),
        "rgcn_b2_cell": (rg["road2cellular"]["b2"]
                         + rg["cellular2cellular"]["b2"]).reshape(1, -1),
        # fused LSTM weights: concat([Wx; Wh]) -> one K=256 matmul per step
        "lstm1_w": jnp.concatenate([params["lstm1"]["wx"], params["lstm1"]["wh"]], axis=0),
        "lstm1_b": params["lstm1"]["b"].reshape(1, -1),
        "lstm2_w": jnp.concatenate([params["lstm2"]["wx"], params["lstm2"]["wh"]], axis=0),
        "lstm2_b": params["lstm2"]["b"].reshape(1, -1),
        # head: split linear3 by the concat halves (cellular part | path part)
        "w3_cell": params["linear3"]["w"][:nhid, :],
        "w3_path": params["linear3"]["w"][nhid:, :],
        "b3": params["linear3"]["b"].reshape(1, -1),
        "wt": params["linear_temp"]["w"], "bt": params["linear_temp"]["b"].reshape(1, -1),
        "w6": params["linear6"]["w"], "b6": params["linear6"]["b"].reshape(1, -1),
    }
    return jax.tree_util.tree_map(lambda x: x.astype(F32), prep)


# --------------------------------- main --------------------------------------

if __name__ == "__main__":
    # forward implies gcn_nfeat == nhid (linear7/linear8 applied to 128-d embeddings)
    NHID = 128
    GCN_NFEAT = 128
    ROAD_N = 24
    CELL_N = 16

    root = jax.random.PRNGKey(0)
    k_params, k_graph, k_dist = jax.random.split(root, 3)

    params = init_params(k_params, NHID, GCN_NFEAT, ROAD_N, CELL_N)
    adj_norm = make_graph(k_graph, ROAD_N, CELL_N)
    prep = prepare_params(params, adj_norm, NHID)

    # batch of 3 variable-length road-id paths
    path_batch_data = [
        [0, 3, 7, 11, 5],
        [2, 9, 14],
        [1, 6, 20, 23],
    ]
    cellular1_id = 2
    cellular2_id = 7

    kd1, kd2 = jax.random.split(k_dist)
    cellular_distance = jax.random.uniform(kd1, (len(path_batch_data), 1), F32) * 10.0
    path_distance = jax.random.uniform(kd2, (len(path_batch_data), 1), F32) * 10.0

    out = trans_model_forward(prep, cellular1_id, cellular2_id, path_batch_data,
                              cellular_distance, path_distance)
    out = jax.block_until_ready(out)

    assert out.shape == (len(path_batch_data), 2)
    assert bool(jnp.all(jnp.isfinite(out)))
    assert bool(jnp.allclose(out.sum(axis=1), 1.0, atol=1e-5))
    print("KERNEL_OK")
</pallas_src>

<mosaic_0001>
module attributes {stable_mosaic.version = 11 : i64} {
  func.func @_rgcn_kernel(%arg0: memref<24x128xf32, #tpu.memory_space<vmem>>, %arg1: memref<16x128xf32, #tpu.memory_space<vmem>>, %arg2: memref<128x128xf32, #tpu.memory_space<vmem>>, %arg3: memref<1x128xf32, #tpu.memory_space<vmem>>, %arg4: memref<128x128xf32, #tpu.memory_space<vmem>>, %arg5: memref<1x128xf32, #tpu.memory_space<vmem>>, %arg6: memref<24x40xf32, #tpu.memory_space<vmem>>, %arg7: memref<16x40xf32, #tpu.memory_space<vmem>>, %arg8: memref<128x256xf32, #tpu.memory_space<vmem>>, %arg9: memref<128x256xf32, #tpu.memory_space<vmem>>, %arg10: memref<1x128xf32, #tpu.memory_space<vmem>>, %arg11: memref<1x128xf32, #tpu.memory_space<vmem>>, %arg12: memref<128x256xf32, #tpu.memory_space<vmem>>, %arg13: memref<128x256xf32, #tpu.memory_space<vmem>>, %arg14: memref<1x128xf32, #tpu.memory_space<vmem>>, %arg15: memref<1x128xf32, #tpu.memory_space<vmem>>, %arg16: memref<24x128xf32, #tpu.memory_space<vmem>>, %arg17: memref<16x128xf32, #tpu.memory_space<vmem>>) attributes {dimension_semantics = [], scalar_prefetch = 0 : i64, scratch_operands = 0 : i64, tpu.core_type = #tpu.core_type<tc>} {
    %c0 = arith.constant 0 : index
    %c0_0 = arith.constant 0 : index
    %0 = vector.load %arg0[%c0, %c0_0] : memref<24x128xf32, #tpu.memory_space<vmem>>, vector<24x128xf32>
    %c0_1 = arith.constant 0 : index
    %c0_2 = arith.constant 0 : index
    %1 = vector.load %arg2[%c0_1, %c0_2] : memref<128x128xf32, #tpu.memory_space<vmem>>, vector<128x128xf32>
    %cst = arith.constant dense<0.000000e+00> : vector<24x128xf32>
    %2 = tpu.matmul %0, %1, %cst {dimension_numbers = #tpu.dot_dimension_numbers<[1], [0], [0], [1], [0, 0, 1, 1], [], []>} : vector<24x128xf32>, vector<128x128xf32>, vector<24x128xf32> -> vector<24x128xf32>
    %c0_3 = arith.constant 0 : index
    %c0_4 = arith.constant 0 : index
    %3 = vector.load %arg3[%c0_3, %c0_4] : memref<1x128xf32, #tpu.memory_space<vmem>>, vector<1x128xf32>
    %4 = vector.broadcast %3 : vector<1x128xf32> to vector<24x128xf32>
    %5 = arith.addf %2, %4 : vector<24x128xf32>
    %c0_5 = arith.constant 0 : index
    %c0_6 = arith.constant 0 : index
    %6 = vector.load %arg1[%c0_5, %c0_6] : memref<16x128xf32, #tpu.memory_space<vmem>>, vector<16x128xf32>
    %c0_7 = arith.constant 0 : index
    %c0_8 = arith.constant 0 : index
    %7 = vector.load %arg4[%c0_7, %c0_8] : memref<128x128xf32, #tpu.memory_space<vmem>>, vector<128x128xf32>
    %cst_9 = arith.constant dense<0.000000e+00> : vector<16x128xf32>
    %8 = tpu.matmul %6, %7, %cst_9 {dimension_numbers = #tpu.dot_dimension_numbers<[1], [0], [0], [1], [0, 0, 1, 1], [], []>} : vector<16x128xf32>, vector<128x128xf32>, vector<16x128xf32> -> vector<16x128xf32>
    %c0_10 = arith.constant 0 : index
    %c0_11 = arith.constant 0 : index
    %9 = vector.load %arg5[%c0_10, %c0_11] : memref<1x128xf32, #tpu.memory_space<vmem>>, vector<1x128xf32>
    %10 = vector.broadcast %9 : vector<1x128xf32> to vector<16x128xf32>
    %11 = arith.addf %8, %10 : vector<16x128xf32>
    %c0_12 = arith.constant 0 : index
    %c0_13 = arith.constant 0 : index
    %12 = vector.load %arg6[%c0_12, %c0_13] : memref<24x40xf32, #tpu.memory_space<vmem>>, vector<24x40xf32>
    %c0_14 = arith.constant 0 : index
    %c0_15 = arith.constant 0 : index
    %13 = vector.load %arg7[%c0_14, %c0_15] : memref<16x40xf32, #tpu.memory_space<vmem>>, vector<16x40xf32>
    %c0_16 = arith.constant 0 : index
    %c0_17 = arith.constant 0 : index
    %14 = vector.load %arg8[%c0_16, %c0_17] : memref<128x256xf32, #tpu.memory_space<vmem>>, vector<128x256xf32>
    %cst_18 = arith.constant dense<0.000000e+00> : vector<24x256xf32>
    %15 = tpu.matmul %5, %14, %cst_18 {dimension_numbers = #tpu.dot_dimension_numbers<[1], [0], [0], [1], [0, 0, 1, 1], [], []>} : vector<24x128xf32>, vector<128x256xf32>, vector<24x256xf32> -> vector<24x256xf32>
    %c0_19 = arith.constant 0 : index
    %c0_20 = arith.constant 0 : index
    %16 = vector.load %arg9[%c0_19, %c0_20] : memref<128x256xf32, #tpu.memory_space<vmem>>, vector<128x256xf32>
    %cst_21 = arith.constant dense<0.000000e+00> : vector<16x256xf32>
    %17 = tpu.matmul %11, %16, %cst_21 {dimension_numbers = #tpu.dot_dimension_numbers<[1], [0], [0], [1], [0, 0, 1, 1], [], []>} : vector<16x128xf32>, vector<128x256xf32>, vector<16x256xf32> -> vector<16x256xf32>
    %18 = vector.extract_strided_slice %15 {offsets = [0, 0], sizes = [24, 128], strides = [1, 1]} : vector<24x256xf32> to vector<24x128xf32>
    %19 = vector.extract_strided_slice %17 {offsets = [0, 0], sizes = [16, 128], strides = [1, 1]} : vector<16x256xf32> to vector<16x128xf32>
    %20 = tpu.concatenate %18, %19 in 0 : vector<24x128xf32>, vector<16x128xf32> -> vector<40x128xf32>
    %21 = vector.extract_strided_slice %15 {offsets = [0, 128], sizes = [24, 128], strides = [1, 1]} : vector<24x256xf32> to vector<24x128xf32>
    %22 = vector.extract_strided_slice %17 {offsets = [0, 128], sizes = [16, 128], strides = [1, 1]} : vector<16x256xf32> to vector<16x128xf32>
    %23 = tpu.concatenate %21, %22 in 0 : vector<24x128xf32>, vector<16x128xf32> -> vector<40x128xf32>
    %cst_22 = arith.constant dense<0.000000e+00> : vector<24x128xf32>
    %24 = tpu.matmul %12, %20, %cst_22 {dimension_numbers = #tpu.dot_dimension_numbers<[1], [0], [0], [1], [0, 0, 1, 1], [], []>} : vector<24x40xf32>, vector<40x128xf32>, vector<24x128xf32> -> vector<24x128xf32>
    %c0_23 = arith.constant 0 : index
    %c0_24 = arith.constant 0 : index
    %25 = vector.load %arg10[%c0_23, %c0_24] : memref<1x128xf32, #tpu.memory_space<vmem>>, vector<1x128xf32>
    %26 = vector.broadcast %25 : vector<1x128xf32> to vector<24x128xf32>
    %27 = arith.addf %24, %26 : vector<24x128xf32>
    %cst_25 = arith.constant dense<0.000000e+00> : vector<16x128xf32>
    %28 = tpu.matmul %13, %23, %cst_25 {dimension_numbers = #tpu.dot_dimension_numbers<[1], [0], [0], [1], [0, 0, 1, 1], [], []>} : vector<16x40xf32>, vector<40x128xf32>, vector<16x128xf32> -> vector<16x128xf32>
    %c0_26 = arith.constant 0 : index
    %c0_27 = arith.constant 0 : index
    %29 = vector.load %arg11[%c0_26, %c0_27] : memref<1x128xf32, #tpu.memory_space<vmem>>, vector<1x128xf32>
    %30 = vector.broadcast %29 : vector<1x128xf32> to vector<16x128xf32>
    %31 = arith.addf %28, %30 : vector<16x128xf32>
    %cst_28 = arith.constant 0.000000e+00 : f32
    %32 = vector.broadcast %cst_28 : f32 to vector<24x128xf32>
    %33 = arith.maximumf %27, %32 : vector<24x128xf32>
    %cst_29 = arith.constant 0.000000e+00 : f32
    %34 = vector.broadcast %cst_29 : f32 to vector<16x128xf32>
    %35 = arith.maximumf %31, %34 : vector<16x128xf32>
    %c0_30 = arith.constant 0 : index
    %c0_31 = arith.constant 0 : index
    %36 = vector.load %arg12[%c0_30, %c0_31] : memref<128x256xf32, #tpu.memory_space<vmem>>, vector<128x256xf32>
    %cst_32 = arith.constant dense<0.000000e+00> : vector<24x256xf32>
    %37 = tpu.matmul %33, %36, %cst_32 {dimension_numbers = #tpu.dot_dimension_numbers<[1], [0], [0], [1], [0, 0, 1, 1], [], []>} : vector<24x128xf32>, vector<128x256xf32>, vector<24x256xf32> -> vector<24x256xf32>
    %c0_33 = arith.constant 0 : index
    %c0_34 = arith.constant 0 : index
    %38 = vector.load %arg13[%c0_33, %c0_34] : memref<128x256xf32, #tpu.memory_space<vmem>>, vector<128x256xf32>
    %cst_35 = arith.constant dense<0.000000e+00> : vector<16x256xf32>
    %39 = tpu.matmul %35, %38, %cst_35 {dimension_numbers = #tpu.dot_dimension_numbers<[1], [0], [0], [1], [0, 0, 1, 1], [], []>} : vector<16x128xf32>, vector<128x256xf32>, vector<16x256xf32> -> vector<16x256xf32>
    %40 = vector.extract_strided_slice %37 {offsets = [0, 0], sizes = [24, 128], strides = [1, 1]} : vector<24x256xf32> to vector<24x128xf32>
    %41 = vector.extract_strided_slice %39 {offsets = [0, 0], sizes = [16, 128], strides = [1, 1]} : vector<16x256xf32> to vector<16x128xf32>
    %42 = tpu.concatenate %40, %41 in 0 : vector<24x128xf32>, vector<16x128xf32> -> vector<40x128xf32>
    %43 = vector.extract_strided_slice %37 {offsets = [0, 128], sizes = [24, 128], strides = [1, 1]} : vector<24x256xf32> to vector<24x128xf32>
    %44 = vector.extract_strided_slice %39 {offsets = [0, 128], sizes = [16, 128], strides = [1, 1]} : vector<16x256xf32> to vector<16x128xf32>
    %45 = tpu.concatenate %43, %44 in 0 : vector<24x128xf32>, vector<16x128xf32> -> vector<40x128xf32>
    %cst_36 = arith.constant dense<0.000000e+00> : vector<24x128xf32>
    %46 = tpu.matmul %12, %42, %cst_36 {dimension_numbers = #tpu.dot_dimension_numbers<[1], [0], [0], [1], [0, 0, 1, 1], [], []>} : vector<24x40xf32>, vector<40x128xf32>, vector<24x128xf32> -> vector<24x128xf32>
    %c0_37 = arith.constant 0 : index
    %c0_38 = arith.constant 0 : index
    %47 = vector.load %arg14[%c0_37, %c0_38] : memref<1x128xf32, #tpu.memory_space<vmem>>, vector<1x128xf32>
    %48 = vector.broadcast %47 : vector<1x128xf32> to vector<24x128xf32>
    %49 = arith.addf %46, %48 : vector<24x128xf32>
    %cst_39 = arith.constant dense<0.000000e+00> : vector<16x128xf32>
    %50 = tpu.matmul %13, %45, %cst_39 {dimension_numbers = #tpu.dot_dimension_numbers<[1], [0], [0], [1], [0, 0, 1, 1], [], []>} : vector<16x40xf32>, vector<40x128xf32>, vector<16x128xf32> -> vector<16x128xf32>
    %c0_40 = arith.constant 0 : index
    %c0_41 = arith.constant 0 : index
    %51 = vector.load %arg15[%c0_40, %c0_41] : memref<1x128xf32, #tpu.memory_space<vmem>>, vector<1x128xf32>
    %52 = vector.broadcast %51 : vector<1x128xf32> to vector<16x128xf32>
    %53 = arith.addf %50, %52 : vector<16x128xf32>
    %c0_42 = arith.constant 0 : index
    %c0_43 = arith.constant 0 : index
    %54 = vector.load %arg16[%c0_42, %c0_43] : memref<24x128xf32, #tpu.memory_space<vmem>>, vector<24x128xf32>
    tpu.vector_store %arg16[%c0_42, %c0_43], %49 {strides = array<i32>} : memref<24x128xf32, #tpu.memory_space<vmem>>, vector<24x128xf32>,
    %c0_44 = arith.constant 0 : index
    %c0_45 = arith.constant 0 : index
    %55 = vector.load %arg17[%c0_44, %c0_45] : memref<16x128xf32, #tpu.memory_space<vmem>>, vector<16x128xf32>
    tpu.vector_store %arg17[%c0_44, %c0_45], %53 {strides = array<i32>} : memref<16x128xf32, #tpu.memory_space<vmem>>, vector<16x128xf32>,
    return
  }
}

</mosaic_0001>

<llo_original>
// kernel: tpu_custom_call.1
$region0: #{tpu_custom_call.1}
  #allocation0 [shape = 'u32[]', space=smem, size = 0x4, offset = 0x4, fixed_abs, tag = 'smem constant byte address 0x4 - core index']
  #allocation1 [shape = 'u32[144,128]{1,0:T(1,128)}', space=vmem, size = 0x12000, scoped, tag = 'internal scratch']
  %s0 = inlined_call_operand.hbm [shape: f32[24,128], index: 0, kind: input, shape index: {}]
  %s1 = inlined_call_operand.hbm [shape: f32[16,128], index: 1, kind: input, shape index: {}]
  %s2 = inlined_call_operand.hbm [shape: f32[128,128], index: 2, kind: input, shape index: {}]
  %s3 = inlined_call_operand.vmem [shape: f32[1,128], index: 3, kind: input, shape index: {}]
  %s4 = inlined_call_operand.hbm [shape: f32[128,128], index: 4, kind: input, shape index: {}]
  %s5 = inlined_call_operand.vmem [shape: f32[1,128], index: 5, kind: input, shape index: {}]
  %s6 = inlined_call_operand.hbm [shape: f32[24,40], index: 6, kind: input, shape index: {}]
  %s7 = inlined_call_operand.vmem [shape: f32[16,40], index: 7, kind: input, shape index: {}]
  %s8 = inlined_call_operand.hbm [shape: f32[128,256], index: 8, kind: input, shape index: {}]
  %s9 = inlined_call_operand.hbm [shape: f32[128,256], index: 9, kind: input, shape index: {}]
  %s10 = inlined_call_operand.vmem [shape: f32[1,128], index: 10, kind: input, shape index: {}]
  %s11 = inlined_call_operand.vmem [shape: f32[1,128], index: 11, kind: input, shape index: {}]
  %s12 = inlined_call_operand.hbm [shape: f32[128,256], index: 12, kind: input, shape index: {}]
  %s13 = inlined_call_operand.hbm [shape: f32[128,256], index: 13, kind: input, shape index: {}]
  %s14 = inlined_call_operand.vmem [shape: f32[1,128], index: 14, kind: input, shape index: {}]
  %s15 = inlined_call_operand.vmem [shape: f32[1,128], index: 15, kind: input, shape index: {}]
  %s16 = inlined_call_operand.hbm [shape: f32[24,128], index: 16, kind: output, shape index: {0}]
  %s17 = inlined_call_operand.hbm [shape: f32[16,128], index: 17, kind: output, shape index: {1}]
  %18 = xla_tuple %s16, %s17
  %s19 = sld [smem:[#allocation0]]
  $region118: #{tpu_custom_call.1} parent=0
    _
  %s21 = ssub.s32 1, %s19
  %s22 = scalar_select 0, %s21, %s19
  $region1: #{tpu_custom_call.1} parent=0
    #allocation2 [shape = 'u8[12288]{0}', space=vmem, size = 0x3000, scoped, tag = 'input window, operand 0, single buffered']
    #allocation3 [shape = 's32[1]{0}', space=sflag, size = 0x4, scoped, tag = 'scoped memory for tpu_custom_call.1']
    #allocation4 [shape = 's32[1]{0}', space=sflag, size = 0x4, scoped, tag = 'scoped memory for tpu_custom_call.1']
    #allocation5 [shape = 'u8[8192]{0}', space=vmem, size = 0x2000, scoped, tag = 'input window, operand 1, single buffered']
    #allocation6 [shape = 's32[1]{0}', space=sflag, size = 0x4, scoped, tag = 'scoped memory for tpu_custom_call.1']
    #allocation7 [shape = 'u8[65536]{0}', space=vmem, size = 0x10000, scoped, tag = 'input window, operand 2, single buffered']
    #allocation8 [shape = 'u8[65536]{0}', space=vmem, size = 0x10000, scoped, tag = 'input window, operand 4, single buffered']
    #allocation9 [shape = 's32[1]{0}', space=sflag, size = 0x4, scoped, tag = 'scoped memory for tpu_custom_call.1']
    #allocation10 [shape = 'u8[12288]{0}', space=vmem, size = 0x3000, scoped, tag = 'input window, operand 6, single buffered']
    #allocation11 [shape = 'u8[131072]{0}', space=vmem, size = 0x20000, scoped, tag = 'input window, operand 8, single buffered']
    #allocation12 [shape = 's32[1]{0}', space=sflag, size = 0x4, scoped, tag = 'scoped memory for tpu_custom_call.1']
    #allocation13 [shape = 'u8[131072]{0}', space=vmem, size = 0x20000, scoped, tag = 'input window, operand 9, single buffered']
    #allocation14 [shape = 'u8[131072]{0}', space=vmem, size = 0x20000, scoped, tag = 'input window, operand 12, single buffered']
    #allocation15 [shape = 's32[1]{0}', space=sflag, size = 0x4, scoped, tag = 'scoped memory for tpu_custom_call.1']
    #allocation16 [shape = 'u8[131072]{0}', space=vmem, size = 0x20000, scoped, tag = 'input window, operand 13, single buffered']
    #allocation17 [shape = 'u8[12288]{0}', space=vmem, size = 0x3000, scoped, tag = 'output window, operand 0, single buffered']
    #allocation18 [shape = 'u8[8192]{0}', space=vmem, size = 0x2000, scoped, tag = 'output window, operand 1, single buffered']
    #allocation19 [shape = 's32[1]{0}', space=sflag, size = 0x4, scoped, tag = 'scoped memory for tpu_custom_call.1']
    %23 = vsyncpa [#allocation3], 0
    %24 = vsyncpa [#allocation6], 0
    %25 = vsyncpa [#allocation9], 0
    %26 = vsyncpa [#allocation12], 0
    %27 = vsyncpa [#allocation15], 0
    %28 = vsyncpa [#allocation4], 0
    %29 = vsyncpa [#allocation19], 0
    // Predicated region
    $region2: #{tpu_custom_call.1} parent=1 // pred_check
      _
    $region3: #{tpu_custom_call.1} parent=1 // pred_check_branch
      %31 = sbr.rel (0) target = $region5
    $region4: #{tpu_custom_call.1} parent=1 // pred_region
      %s33 = ssub.s32 384, 384
      %34 = vsyncadd [#allocation3], %s33
      %s35 = sshll.u32 [#allocation2], 4
      %s36 = int_to_ptr.vmem [resolvable:$true] %s35
      %41 = dma.hbm_to_vmem [thread:$0]  %s0, 384, %s36, [#allocation3], 128, 128, 8
    $region5: #{tpu_custom_call.1} parent=1 // pred_fallthru
      _
    // Predicated region
    $region6: #{tpu_custom_call.1} parent=1 // pred_check
      _
    $region7: #{tpu_custom_call.1} parent=1 // pred_check_branch
      %43 = sbr.rel (0) target = $region9
    $region8: #{tpu_custom_call.1} parent=1 // pred_region
      %s45 = ssub.s32 256, 256
      %46 = vsyncadd [#allocation6], %s45
      %s47 = sshll.u32 [#allocation5], 4
      %s48 = int_to_ptr.vmem [resolvable:$true] %s47
      %53 = dma.hbm_to_vmem [thread:$0]  %s1, 256, %s48, [#allocation6], 128, 128, 8
    $region9: #{tpu_custom_call.1} parent=1 // pred_fallthru
      _
    // Predicated region
    $region10: #{tpu_custom_call.1} parent=1 // pred_check
      _
    $region11: #{tpu_custom_call.1} parent=1 // pred_check_branch
      %55 = sbr.rel (0) target = $region13
    $region12: #{tpu_custom_call.1} parent=1 // pred_region
      %s57 = ssub.s32 2048, 2048
      %58 = vsyncadd [#allocation6], %s57
      %s59 = sshll.u32 [#allocation7], 4
      %s60 = int_to_ptr.vmem [resolvable:$true] %s59
      %65 = dma.hbm_to_vmem [thread:$0]  %s2, 2048, %s60, [#allocation6], 128, 128, 8
    $region13: #{tpu_custom_call.1} parent=1 // pred_fallthru
      _
    // Predicated region
    $region14: #{tpu_custom_call.1} parent=1 // pred_check
      _
    $region15: #{tpu_custom_call.1} parent=1 // pred_check_branch
      %67 = sbr.rel (0) target = $region17
    $region16: #{tpu_custom_call.1} parent=1 // pred_region
      _
    $region17: #{tpu_custom_call.1} parent=1 // pred_fallthru
      _
    // Predicated region
    $region18: #{tpu_custom_call.1} parent=1 // pred_check
      _
    $region19: #{tpu_custom_call.1} parent=1 // pred_check_branch
      %69 = sbr.rel (0) target = $region21
    $region20: #{tpu_custom_call.1} parent=1 // pred_region
      %s71 = ssub.s32 2048, 2048
      %72 = vsyncadd [#allocation9], %s71
      %s73 = sshll.u32 [#allocation8], 4
      %s74 = int_to_ptr.vmem [resolvable:$true] %s73
      %79 = dma.hbm_to_vmem [thread:$0]  %s4, 2048, %s74, [#allocation9], 128, 128, 8
    $region21: #{tpu_custom_call.1} parent=1 // pred_fallthru
      _
    // Predicated region
    $region22: #{tpu_custom_call.1} parent=1 // pred_check
      _
    $region23: #{tpu_custom_call.1} parent=1 // pred_check_branch
      %81 = sbr.rel (0) target = $region25
    $region24: #{tpu_custom_call.1} parent=1 // pred_region
      _
    $region25: #{tpu_custom_call.1} parent=1 // pred_fallthru
      _
    // Predicated region
    $region26: #{tpu_custom_call.1} parent=1 // pred_check
      _
    $region27: #{tpu_custom_call.1} parent=1 // pred_check_branch
      %83 = sbr.rel (0) target = $region29
    $region28: #{tpu_custom_call.1} parent=1 // pred_region
      %s85 = ssub.s32 384, 384
      %86 = vsyncadd [#allocation9], %s85
      %s87 = sshll.u32 [#allocation10], 4
      %s88 = int_to_ptr.vmem [resolvable:$true] %s87
      %93 = dma.hbm_to_vmem [thread:$0]  %s6, 384, %s88, [#allocation9], 128, 128, 8
    $region29: #{tpu_custom_call.1} parent=1 // pred_fallthru
      _
    // Predicated region
    $region30: #{tpu_custom_call.1} parent=1 // pred_check
      _
    $region31: #{tpu_custom_call.1} parent=1 // pred_check_branch
      %95 = sbr.rel (0) target = $region33
    $region32: #{tpu_custom_call.1} parent=1 // pred_region
      _
    $region33: #{tpu_custom_call.1} parent=1 // pred_fallthru
      _
    // Predicated region
    $region34: #{tpu_custom_call.1} parent=1 // pred_check
      _
    $region35: #{tpu_custom_call.1} parent=1 // pred_check_branch
      %97 = sbr.rel (0) target = $region37
    $region36: #{tpu_custom_call.1} parent=1 // pred_region
      %s99 = ssub.s32 4096, 4096
      %100 = vsyncadd [#allocation12], %s99
      %s101 = sshll.u32 [#allocation11], 4
      %s102 = int_to_ptr.vmem [resolvable:$true] %s101
      %107 = dma.hbm_to_vmem [thread:$0]  %s8, 4096, %s102, [#allocation12], 256, 256, 16
    $region37: #{tpu_custom_call.1} parent=1 // pred_fallthru
      _
    // Predicated region
    $region38: #{tpu_custom_call.1} parent=1 // pred_check
      _
    $region39: #{tpu_custom_call.1} parent=1 // pred_check_branch
      %109 = sbr.rel (0) target = $region41
    $region40: #{tpu_custom_call.1} parent=1 // pred_region
      %s111 = ssub.s32 4096, 4096
      %112 = vsyncadd [#allocation12], %s111
      %s113 = sshll.u32 [#allocation13], 4
      %s114 = int_to_ptr.vmem [resolvable:$true] %s113
      %119 = dma.hbm_to_vmem [thread:$0]  %s9, 4096, %s114, [#allocation12], 256, 256, 16
    $region41: #{tpu_custom_call.1} parent=1 // pred_fallthru
      _
    // Predicated region
    $region42: #{tpu_custom_call.1} parent=1 // pred_check
      _
    $region43: #{tpu_custom_call.1} parent=1 // pred_check_branch
      %121 = sbr.rel (0) target = $region45
    $region44: #{tpu_custom_call.1} parent=1 // pred_region
      _
    $region45: #{tpu_custom_call.1} parent=1 // pred_fallthru
      _
    // Predicated region
    $region46: #{tpu_custom_call.1} parent=1 // pred_check
      _
    $region47: #{tpu_custom_call.1} parent=1 // pred_check_branch
      %123 = sbr.rel (0) target = $region49
    $region48: #{tpu_custom_call.1} parent=1 // pred_region
      _
    $region49: #{tpu_custom_call.1} parent=1 // pred_fallthru
      _
    // Predicated region
    $region50: #{tpu_custom_call.1} parent=1 // pred_check
      _
    $region51: #{tpu_custom_call.1} parent=1 // pred_check_branch
      %125 = sbr.rel (0) target = $region53
    $region52: #{tpu_custom_call.1} parent=1 // pred_region
      %s127 = ssub.s32 4096, 4096
      %128 = vsyncadd [#allocation15], %s127
      %s129 = sshll.u32 [#allocation14], 4
      %s130 = int_to_ptr.vmem [resolvable:$true] %s129
      %135 = dma.hbm_to_vmem [thread:$0]  %s12, 4096, %s130, [#allocation15], 256, 256, 16
    $region53: #{tpu_custom_call.1} parent=1 // pred_fallthru
      _
    // Predicated region
    $region54: #{tpu_custom_call.1} parent=1 // pred_check
      _
    $region55: #{tpu_custom_call.1} parent=1 // pred_check_branch
      %137 = sbr.rel (0) target = $region57
    $region56: #{tpu_custom_call.1} parent=1 // pred_region
      %s139 = ssub.s32 4096, 4096
      %140 = vsyncadd [#allocation15], %s139
      %s141 = sshll.u32 [#allocation16], 4
      %s142 = int_to_ptr.vmem [resolvable:$true] %s141
      %147 = dma.hbm_to_vmem [thread:$0]  %s13, 4096, %s142, [#allocation15], 256, 256, 16
    $region57: #{tpu_custom_call.1} parent=1 // pred_fallthru
      _
    // Predicated region
    $region58: #{tpu_custom_call.1} parent=1 // pred_check
      _
    $region59: #{tpu_custom_call.1} parent=1 // pred_check_branch
      %149 = sbr.rel (0) target = $region61
    $region60: #{tpu_custom_call.1} parent=1 // pred_region
      _
    $region61: #{tpu_custom_call.1} parent=1 // pred_fallthru
      _
    // Predicated region
    $region62: #{tpu_custom_call.1} parent=1 // pred_check
      _
    $region63: #{tpu_custom_call.1} parent=1 // pred_check_branch
      %151 = sbr.rel (0) target = $region65
    $region64: #{tpu_custom_call.1} parent=1 // pred_region
      _
    $region65: #{tpu_custom_call.1} parent=1 // pred_fallthru
      _
    // Predicated region
    $region66: #{tpu_custom_call.1} parent=1 // pred_check
      _
    $region67: #{tpu_custom_call.1} parent=1 // pred_check_branch
      %153 = sbr.rel (0) target = $region69
    $region68: #{tpu_custom_call.1} parent=1 // pred_region
      %154 = dma.done [#allocation3], 384
    $region69: #{tpu_custom_call.1} parent=1 // pred_fallthru
      _
    // Predicated region
    $region70: #{tpu_custom_call.1} parent=1 // pred_check
      _
    $region71: #{tpu_custom_call.1} parent=1 // pred_check_branch
      %156 = sbr.rel (0) target = $region73
    $region72: #{tpu_custom_call.1} parent=1 // pred_region
      %157 = dma.done [#allocation6], 256
    $region73: #{tpu_custom_call.1} parent=1 // pred_fallthru
      _
    // Predicated region
    $region74: #{tpu_custom_call.1} parent=1 // pred_check
      _
    $region75: #{tpu_custom_call.1} parent=1 // pred_check_branch
      %159 = sbr.rel (0) target = $region77
    $region76: #{tpu_custom_call.1} parent=1 // pred_region
      %160 = dma.done [#allocation6], 2048
    $region77: #{tpu_custom_call.1} parent=1 // pred_fallthru
      _
    // Predicated region
    $region78: #{tpu_custom_call.1} parent=1 // pred_check
      _
    $region79: #{tpu_custom_call.1} parent=1 // pred_check_branch
      %162 = sbr.rel (0) target = $region81
    $region80: #{tpu_custom_call.1} parent=1 // pred_region
      %163 = dma.done [#allocation9], 2048
    $region81: #{tpu_custom_call.1} parent=1 // pred_fallthru
      _
    // Predicated region
    $region82: #{tpu_custom_call.1} parent=1 // pred_check
      _
    $region83: #{tpu_custom_call.1} parent=1 // pred_check_branch
      %165 = sbr.rel (0) target = $region85
    $region84: #{tpu_custom_call.1} parent=1 // pred_region
      %166 = dma.done [#allocation9], 384
    $region85: #{tpu_custom_call.1} parent=1 // pred_fallthru
      _
    // Predicated region
    $region86: #{tpu_custom_call.1} parent=1 // pred_check
      _
    $region87: #{tpu_custom_call.1} parent=1 // pred_check_branch
      %168 = sbr.rel (0) target = $region89
    $region88: #{tpu_custom_call.1} parent=1 // pred_region
      %169 = dma.done [#allocation12], 4096
    $region89: #{tpu_custom_call.1} parent=1 // pred_fallthru
      _
    // Predicated region
    $region90: #{tpu_custom_call.1} parent=1 // pred_check
      _
    $region91: #{tpu_custom_call.1} parent=1 // pred_check_branch
      %171 = sbr.rel (0) target = $region93
    $region92: #{tpu_custom_call.1} parent=1 // pred_region
      %172 = dma.done [#allocation12], 4096
    $region93: #{tpu_custom_call.1} parent=1 // pred_fallthru
      _
    // Predicated region
    $region94: #{tpu_custom_call.1} parent=1 // pred_check
      _
    $region95: #{tpu_custom_call.1} parent=1 // pred_check_branch
      %174 = sbr.rel (0) target = $region97
    $region96: #{tpu_custom_call.1} parent=1 // pred_region
      %175 = dma.done [#allocation15], 4096
    $region97: #{tpu_custom_call.1} parent=1 // pred_fallthru
      _
    // Predicated region
    $region98: #{tpu_custom_call.1} parent=1 // pred_check
      _
    $region99: #{tpu_custom_call.1} parent=1 // pred_check_branch
      %177 = sbr.rel (0) target = $region101
    $region100: #{tpu_custom_call.1} parent=1 // pred_region
      %178 = dma.done [#allocation15], 4096
    $region101: #{tpu_custom_call.1} parent=1 // pred_fallthru
      _
    %v179 = vld [vmem:[#allocation2] sm:$0xff]
    %v180 = vld [vmem:[#allocation2 + $0x8] sm:$0xff]
    %v181 = vld [vmem:[#allocation2 + $0x10] sm:$0xff]
    %v182 = vld [vmem:[#allocation7] sm:$0xff]
    %v183 = vld [vmem:[#allocation7 + $0x8] sm:$0xff]
    %v184 = vld [vmem:[#allocation7 + $0x10] sm:$0xff]
    %v185 = vld [vmem:[#allocation7 + $0x18] sm:$0xff]
    %v186 = vld [vmem:[#allocation7 + $0x20] sm:$0xff]
    %v187 = vld [vmem:[#allocation7 + $0x28] sm:$0xff]
    %v188 = vld [vmem:[#allocation7 + $0x30] sm:$0xff]
    %v189 = vld [vmem:[#allocation7 + $0x38] sm:$0xff]
    %v190 = vld [vmem:[#allocation7 + $0x40] sm:$0xff]
    %v191 = vld [vmem:[#allocation7 + $0x48] sm:$0xff]
    %v192 = vld [vmem:[#allocation7 + $0x50] sm:$0xff]
    %v193 = vld [vmem:[#allocation7 + $0x58] sm:$0xff]
    %v194 = vld [vmem:[#allocation7 + $0x60] sm:$0xff]
    %v195 = vld [vmem:[#allocation7 + $0x68] sm:$0xff]
    %v196 = vld [vmem:[#allocation7 + $0x70] sm:$0xff]
    %v197 = vld [vmem:[#allocation7 + $0x78] sm:$0xff]
    %v198 = vld [vmem:[%s3] sm:$0x1]
    %v200 = vlaneseq
    %v201 = vshrl.u32 %v200, 7
    %v202 = vsub.s32 0, %v201
    %v203 = vrot.slane %v198, %v202
    %205 = vmatprep.subr.mxu0 0.0
    %206 = vmatpush1.msra.mxu0 %v182
    %207 = vmatprep.subr.mxu0 0.0
    %208 = vmatpush1.msra.mxu0 %v183
    %209 = vmatprep.subr.mxu0 0.0
    %210 = vmatpush1.msra.mxu0 %v184
    %211 = vmatprep.subr.mxu0 0.0
    %212 = vmatpush1.msra.mxu0 %v185
    %213 = vmatprep.subr.mxu0 0.0
    %214 = vmatpush1.msra.mxu0 %v186
    %215 = vmatprep.subr.mxu0 0.0
    %216 = vmatpush1.msra.mxu0 %v187
    %217 = vmatprep.subr.mxu0 0.0
    %218 = vmatpush1.msra.mxu0 %v188
    %219 = vmatprep.subr.mxu0 0.0
    %220 = vmatpush1.msra.mxu0 %v189
    %221 = vmatprep.subr.mxu0 0.0
    %222 = vmatpush1.msra.mxu0 %v190
    %223 = vmatprep.subr.mxu0 0.0
    %224 = vmatpush1.msra.mxu0 %v191
    %225 = vmatprep.subr.mxu0 0.0
    %226 = vmatpush1.msra.mxu0 %v192
    %227 = vmatprep.subr.mxu0 0.0
    %228 = vmatpush1.msra.mxu0 %v193
    %229 = vmatprep.subr.mxu0 0.0
    %230 = vmatpush1.msra.mxu0 %v194
    %231 = vmatprep.subr.mxu0 0.0
    %232 = vmatpush1.msra.mxu0 %v195
    %233 = vmatprep.subr.mxu0 0.0
    %234 = vmatpush1.msra.mxu0 %v196
    %235 = vmatprep.subr.mxu0 0.0
    %236 = vmatpush1.msra.mxu0 %v197
    %237 = vmatprep.subr.mxu0 0.0
    %238 = vmatpush1.msra.mxu0 0.0
    %239 = vmatprep.subr.mxu0 0.0
    %240 = vmatpush1.msra.mxu0 0.0
    %241 = vmatprep.subr.mxu0 0.0
    %242 = vmatpush1.msra.mxu0 0.0
    %243 = vmatprep.subr.mxu0 0.0
    %244 = vmatpush1.msra.mxu0 0.0
    %245 = vmatprep.subr.mxu0 0.0
    %246 = vmatpush1.msra.mxu0 0.0
    %247 = vmatprep.subr.mxu0 0.0
    %248 = vmatpush1.msra.mxu0 0.0
    %249 = vmatprep.subr.mxu0 0.0
    %250 = vmatpush1.msra.mxu0 0.0
    %251 = vmatprep.subr.mxu0 0.0
    %252 = vmatpush1.msra.mxu0 0.0
    %253 = vmatprep.subr.mxu0 0.0
    %254 = vmatpush1.msra.mxu0 0.0
    %255 = vmatprep.subr.mxu0 0.0
    %256 = vmatpush1.msra.mxu0 0.0
    %257 = vmatprep.subr.mxu0 0.0
    %258 = vmatpush1.msra.mxu0 0.0
    %259 = vmatprep.subr.mxu0 0.0
    %260 = vmatpush1.msra.mxu0 0.0
    %261 = vmatprep.subr.mxu0 0.0
    %262 = vmatpush1.msra.mxu0 0.0
    %263 = vmatprep.subr.mxu0 0.0
    %264 = vmatpush1.msra.mxu0 0.0
    %265 = vmatprep.subr.mxu0 0.0
    %266 = vmatpush1.msra.mxu0 0.0
    %267 = vmatprep.subr.mxu0 0.0
    %268 = vmatpush1.msra.mxu0 0.0
    %269 = vmatprep.mubr.f32.mxu0 0.0
    %270 = vmatmul.mubr.f32.gmra.mrb[0].mxu0 %v179
    %v271 = vpop.f32.mrb[0].mxu0
    %v272 = vadd.f32 %v203, %v271
    %v273 = vpop.f32.mrb[0].mxu0
    %274 = vmatprep.mubr.f32.mxu0 0.0
    %275 = vmatmul.mubr.f32.gmra.mrb[0].mxu0 %v180
    %v276 = vpop.f32.mrb[0].mxu0
    %v277 = vadd.f32 %v203, %v276
    %v278 = vpop.f32.mrb[0].mxu0
    %279 = vmatprep.mubr.f32.mxu0 0.0
    %280 = vmatmul.mubr.f32.gmra.mrb[0].mxu0 %v181
    %v281 = vpop.f32.mrb[0].mxu0
    %v282 = vadd.f32 %v203, %v281
    %v283 = vpop.f32.mrb[0].mxu0
    %284 = vdwg.mxu0
    %v285 = vld [vmem:[#allocation5] sm:$0xff]
    %v286 = vld [vmem:[#allocation5 + $0x8] sm:$0xff]
    %v287 = vld [vmem:[#allocation8] sm:$0xff]
    %v288 = vld [vmem:[#allocation8 + $0x8] sm:$0xff]
    %v289 = vld [vmem:[#allocation8 + $0x10] sm:$0xff]
    %v290 = vld [vmem:[#allocation8 + $0x18] sm:$0xff]
    %v291 = vld [vmem:[#allocation8 + $0x20] sm:$0xff]
    %v292 = vld [vmem:[#allocation8 + $0x28] sm:$0xff]
    %v293 = vld [vmem:[#allocation8 + $0x30] sm:$0xff]
    %v294 = vld [vmem:[#allocation8 + $0x38] sm:$0xff]
    %v295 = vld [vmem:[#allocation8 + $0x40] sm:$0xff]
    %v296 = vld [vmem:[#allocation8 + $0x48] sm:$0xff]
    %v297 = vld [vmem:[#allocation8 + $0x50] sm:$0xff]
    %v298 = vld [vmem:[#allocation8 + $0x58] sm:$0xff]
    %v299 = vld [vmem:[#allocation8 + $0x60] sm:$0xff]
    %v300 = vld [vmem:[#allocation8 + $0x68] sm:$0xff]
    %v301 = vld [vmem:[#allocation8 + $0x70] sm:$0xff]
    %v302 = vld [vmem:[#allocation8 + $0x78] sm:$0xff]
    %v303 = vld [vmem:[%s5] sm:$0x1]
    %v305 = vlaneseq
    %v306 = vshrl.u32 %v305, 7
    %v307 = vsub.s32 0, %v306
    %v308 = vrot.slane %v303, %v307
    %310 = vmatprep.subr.mxu0 0.0
    %311 = vmatpush1.msra.mxu0 %v287
    %312 = vmatprep.subr.mxu0 0.0
    %313 = vmatpush1.msra.mxu0 %v288
    %314 = vmatprep.subr.mxu0 0.0
    %315 = vmatpush1.msra.mxu0 %v289
    %316 = vmatprep.subr.mxu0 0.0
    %317 = vmatpush1.msra.mxu0 %v290
    %318 = vmatprep.subr.mxu0 0.0
    %319 = vmatpush1.msra.mxu0 %v291
    %320 = vmatprep.subr.mxu0 0.0
    %321 = vmatpush1.msra.mxu0 %v292
    %322 = vmatprep.subr.mxu0 0.0
    %323 = vmatpush1.msra.mxu0 %v293
    %324 = vmatprep.subr.mxu0 0.0
    %325 = vmatpush1.msra.mxu0 %v294
    %326 = vmatprep.subr.mxu0 0.0
    %327 = vmatpush1.msra.mxu0 %v295
    %328 = vmatprep.subr.mxu0 0.0
    %329 = vmatpush1.msra.mxu0 %v296
    %330 = vmatprep.subr.mxu0 0.0
    %331 = vmatpush1.msra.mxu0 %v297
    %332 = vmatprep.subr.mxu0 0.0
    %333 = vmatpush1.msra.mxu0 %v298
    %334 = vmatprep.subr.mxu0 0.0
    %335 = vmatpush1.msra.mxu0 %v299
    %336 = vmatprep.subr.mxu0 0.0
    %337 = vmatpush1.msra.mxu0 %v300
    %338 = vmatprep.subr.mxu0 0.0
    %339 = vmatpush1.msra.mxu0 %v301
    %340 = vmatprep.subr.mxu0 0.0
    %341 = vmatpush1.msra.mxu0 %v302
    %342 = vmatprep.subr.mxu0 0.0
    %343 = vmatpush1.msra.mxu0 0.0
    %344 = vmatprep.subr.mxu0 0.0
    %345 = vmatpush1.msra.mxu0 0.0
    %346 = vmatprep.subr.mxu0 0.0
    %347 = vmatpush1.msra.mxu0 0.0
    %348 = vmatprep.subr.mxu0 0.0
    %349 = vmatpush1.msra.mxu0 0.0
    %350 = vmatprep.subr.mxu0 0.0
    %351 = vmatpush1.msra.mxu0 0.0
    %352 = vmatprep.subr.mxu0 0.0
    %353 = vmatpush1.msra.mxu0 0.0
    %354 = vmatprep.subr.mxu0 0.0
    %355 = vmatpush1.msra.mxu0 0.0
    %356 = vmatprep.subr.mxu0 0.0
    %357 = vmatpush1.msra.mxu0 0.0
    %358 = vmatprep.subr.mxu0 0.0
    %359 = vmatpush1.msra.mxu0 0.0
    %360 = vmatprep.subr.mxu0 0.0
    %361 = vmatpush1.msra.mxu0 0.0
    %362 = vmatprep.subr.mxu0 0.0
    %363 = vmatpush1.msra.mxu0 0.0
    %364 = vmatprep.subr.mxu0 0.0
    %365 = vmatpush1.msra.mxu0 0.0
    %366 = vmatprep.subr.mxu0 0.0
    %367 = vmatpush1.msra.mxu0 0.0
    %368 = vmatprep.subr.mxu0 0.0
    %369 = vmatpush1.msra.mxu0 0.0
    %370 = vmatprep.subr.mxu0 0.0
    %371 = vmatpush1.msra.mxu0 0.0
    %372 = vmatprep.subr.mxu0 0.0
    %373 = vmatpush1.msra.mxu0 0.0
    %374 = vmatprep.mubr.f32.mxu0 0.0
    %375 = vmatmul.mubr.f32.gmra.mrb[0].mxu0 %v285
    %v376 = vpop.f32.mrb[0].mxu0
    %v377 = vadd.f32 %v308, %v376
    %v378 = vpop.f32.mrb[0].mxu0
    %379 = vmatprep.mubr.f32.mxu0 0.0
    %380 = vmatmul.mubr.f32.gmra.mrb[0].mxu0 %v286
    %v381 = vpop.f32.mrb[0].mxu0
    %v382 = vadd.f32 %v308, %v381
    %v383 = vpop.f32.mrb[0].mxu0
    %384 = vdwg.mxu0
    %v385 = vld [vmem:[#allocation10] sm:$0xff]
    %v386 = vld [vmem:[#allocation10 + $0x8] sm:$0xff]
    %v387 = vld [vmem:[#allocation10 + $0x10] sm:$0xff]
    %v388 = vld [vmem:[%s7] sm:$0xff]
    %v389 = vld [vmem:[%s7 + $0x8] sm:$0xff]
    %v390 = vld [vmem:[#allocation11] sm:$0xff]
    %v391 = vld [vmem:[#allocation11 + $0x8] sm:$0xff]
    %v392 = vld [vmem:[#allocation11 + $0x10] sm:$0xff]
    %v393 = vld [vmem:[#allocation11 + $0x18] sm:$0xff]
    %v394 = vld [vmem:[#allocation11 + $0x20] sm:$0xff]
    %v395 = vld [vmem:[#allocation11 + $0x28] sm:$0xff]
    %v396 = vld [vmem:[#allocation11 + $0x30] sm:$0xff]
    %v397 = vld [vmem:[#allocation11 + $0x38] sm:$0xff]
    %v398 = vld [vmem:[#allocation11 + $0x40] sm:$0xff]
    %v399 = vld [vmem:[#allocation11 + $0x48] sm:$0xff]
    %v400 = vld [vmem:[#allocation11 + $0x50] sm:$0xff]
    %v401 = vld [vmem:[#allocation11 + $0x58] sm:$0xff]
    %v402 = vld [vmem:[#allocation11 + $0x60] sm:$0xff]
    %v403 = vld [vmem:[#allocation11 + $0x68] sm:$0xff]
    %v404 = vld [vmem:[#allocation11 + $0x70] sm:$0xff]
    %v405 = vld [vmem:[#allocation11 + $0x78] sm:$0xff]
    %v406 = vld [vmem:[#allocation11 + $0x80] sm:$0xff]
    %v407 = vld [vmem:[#allocation11 + $0x88] sm:$0xff]
    %v408 = vld [vmem:[#allocation11 + $0x90] sm:$0xff]
    %v409 = vld [vmem:[#allocation11 + $0x98] sm:$0xff]
    %v410 = vld [vmem:[#allocation11 + $0xa0] sm:$0xff]
    %v411 = vld [vmem:[#allocation11 + $0xa8] sm:$0xff]
    %v412 = vld [vmem:[#allocation11 + $0xb0] sm:$0xff]
    %v413 = vld [vmem:[#allocation11 + $0xb8] sm:$0xff]
    %v414 = vld [vmem:[#allocation11 + $0xc0] sm:$0xff]
    %v415 = vld [vmem:[#allocation11 + $0xc8] sm:$0xff]
    %v416 = vld [vmem:[#allocation11 + $0xd0] sm:$0xff]
    %v417 = vld [vmem:[#allocation11 + $0xd8] sm:$0xff]
    %v418 = vld [vmem:[#allocation11 + $0xe0] sm:$0xff]
    %v419 = vld [vmem:[#allocation11 + $0xe8] sm:$0xff]
    %v420 = vld [vmem:[#allocation11 + $0xf0] sm:$0xff]
    %v421 = vld [vmem:[#allocation11 + $0xf8] sm:$0xff]
    %422 = vmatprep.subr.mxu0 %v391
    %423 = vmatpush1.msra.mxu0 %v390
    %424 = vmatprep.subr.mxu0 %v393
    %425 = vmatpush1.msra.mxu0 %v392
    %426 = vmatprep.subr.mxu0 %v395
    %427 = vmatpush1.msra.mxu0 %v394
    %428 = vmatprep.subr.mxu0 %v397
    %429 = vmatpush1.msra.mxu0 %v396
    %430 = vmatprep.subr.mxu0 %v399
    %431 = vmatpush1.msra.mxu0 %v398
    %432 = vmatprep.subr.mxu0 %v401
    %433 = vmatpush1.msra.mxu0 %v400
    %434 = vmatprep.subr.mxu0 %v403
    %435 = vmatpush1.msra.mxu0 %v402
    %436 = vmatprep.subr.mxu0 %v405
    %437 = vmatpush1.msra.mxu0 %v404
    %438 = vmatprep.subr.mxu0 %v407
    %439 = vmatpush1.msra.mxu0 %v406
    %440 = vmatprep.subr.mxu0 %v409
    %441 = vmatpush1.msra.mxu0 %v408
    %442 = vmatprep.subr.mxu0 %v411
    %443 = vmatpush1.msra.mxu0 %v410
    %444 = vmatprep.subr.mxu0 %v413
    %445 = vmatpush1.msra.mxu0 %v412
    %446 = vmatprep.subr.mxu0 %v415
    %447 = vmatpush1.msra.mxu0 %v414
    %448 = vmatprep.subr.mxu0 %v417
    %449 = vmatpush1.msra.mxu0 %v416
    %450 = vmatprep.subr.mxu0 %v419
    %451 = vmatpush1.msra.mxu0 %v418
    %452 = vmatprep.subr.mxu0 %v421
    %453 = vmatpush1.msra.mxu0 %v420
    %454 = vmatprep.subr.mxu0 0.0
    %455 = vmatpush1.msra.mxu0 0.0
    %456 = vmatprep.subr.mxu0 0.0
    %457 = vmatpush1.msra.mxu0 0.0
    %458 = vmatprep.subr.mxu0 0.0
    %459 = vmatpush1.msra.mxu0 0.0
    %460 = vmatprep.subr.mxu0 0.0
    %461 = vmatpush1.msra.mxu0 0.0
    %462 = vmatprep.subr.mxu0 0.0
    %463 = vmatpush1.msra.mxu0 0.0
    %464 = vmatprep.subr.mxu0 0.0
    %465 = vmatpush1.msra.mxu0 0.0
    %466 = vmatprep.subr.mxu0 0.0
    %467 = vmatpush1.msra.mxu0 0.0
    %468 = vmatprep.subr.mxu0 0.0
    %469 = vmatpush1.msra.mxu0 0.0
    %470 = vmatprep.subr.mxu0 0.0
    %471 = vmatpush1.msra.mxu0 0.0
    %472 = vmatprep.subr.mxu0 0.0
    %473 = vmatpush1.msra.mxu0 0.0
    %474 = vmatprep.subr.mxu0 0.0
    %475 = vmatpush1.msra.mxu0 0.0
    %476 = vmatprep.subr.mxu0 0.0
    %477 = vmatpush1.msra.mxu0 0.0
    %478 = vmatprep.subr.mxu0 0.0
    %479 = vmatpush1.msra.mxu0 0.0
    %480 = vmatprep.subr.mxu0 0.0
    %481 = vmatpush1.msra.mxu0 0.0
    %482 = vmatprep.subr.mxu0 0.0
    %483 = vmatpush1.msra.mxu0 0.0
    %484 = vmatprep.subr.mxu0 0.0
    %485 = vmatpush1.msra.mxu0 0.0
    %486 = vmatprep.mubr.f32.mxu0 0.0
    %487 = vmatmul.mubr.f32.gmra.mrb[0].mxu0 %v272
    %v488 = vpop.f32.mrb[0].mxu0
    %v489 = vadd.f32 0.0, %v488
    %v490 = vpop.f32.mrb[0].mxu0
    %v491 = vadd.f32 0.0, %v490
    %492 = vmatprep.mubr.f32.mxu0 0.0
    %493 = vmatmul.mubr.f32.gmra.mrb[0].mxu0 %v277
    %v494 = vpop.f32.mrb[0].mxu0
    %v495 = vadd.f32 0.0, %v494
    %v496 = vpop.f32.mrb[0].mxu0
    %v497 = vadd.f32 0.0, %v496
    %498 = vmatprep.mubr.f32.mxu0 0.0
    %499 = vmatmul.mubr.f32.gmra.mrb[0].mxu0 %v282
    %v500 = vpop.f32.mrb[0].mxu0
    %v501 = vadd.f32 0.0, %v500
    %v502 = vpop.f32.mrb[0].mxu0
    %v503 = vadd.f32 0.0, %v502
    %504 = vdwg.mxu0
    %v505 = vld [vmem:[#allocation13] sm:$0xff]
    %v506 = vld [vmem:[#allocation13 + $0x8] sm:$0xff]
    %v507 = vld [vmem:[#allocation13 + $0x10] sm:$0xff]
    %v508 = vld [vmem:[#allocation13 + $0x18] sm:$0xff]
    %v509 = vld [vmem:[#allocation13 + $0x20] sm:$0xff]
    %v510 = vld [vmem:[#allocation13 + $0x28] sm:$0xff]
    %v511 = vld [vmem:[#allocation13 + $0x30] sm:$0xff]
    %v512 = vld [vmem:[#allocation13 + $0x38] sm:$0xff]
    %v513 = vld [vmem:[#allocation13 + $0x40] sm:$0xff]
    %v514 = vld [vmem:[#allocation13 + $0x48] sm:$0xff]
    %v515 = vld [vmem:[#allocation13 + $0x50] sm:$0xff]
    %v516 = vld [vmem:[#allocation13 + $0x58] sm:$0xff]
    %v517 = vld [vmem:[#allocation13 + $0x60] sm:$0xff]
    %v518 = vld [vmem:[#allocation13 + $0x68] sm:$0xff]
    %v519 = vld [vmem:[#allocation13 + $0x70] sm:$0xff]
    %v520 = vld [vmem:[#allocation13 + $0x78] sm:$0xff]
    %v521 = vld [vmem:[#allocation13 + $0x80] sm:$0xff]
    %v522 = vld [vmem:[#allocation13 + $0x88] sm:$0xff]
    %v523 = vld [vmem:[#allocation13 + $0x90] sm:$0xff]
    %v524 = vld [vmem:[#allocation13 + $0x98] sm:$0xff]
    %v525 = vld [vmem:[#allocation13 + $0xa0] sm:$0xff]
    %v526 = vld [vmem:[#allocation13 + $0xa8] sm:$0xff]
    %v527 = vld [vmem:[#allocation13 + $0xb0] sm:$0xff]
    %v528 = vld [vmem:[#allocation13 + $0xb8] sm:$0xff]
    %v529 = vld [vmem:[#allocation13 + $0xc0] sm:$0xff]
    %v530 = vld [vmem:[#allocation13 + $0xc8] sm:$0xff]
    %v531 = vld [vmem:[#allocation13 + $0xd0] sm:$0xff]
    %v532 = vld [vmem:[#allocation13 + $0xd8] sm:$0xff]
    %v533 = vld [vmem:[#allocation13 + $0xe0] sm:$0xff]
    %v534 = vld [vmem:[#allocation13 + $0xe8] sm:$0xff]
    %v535 = vld [vmem:[#allocation13 + $0xf0] sm:$0xff]
    %v536 = vld [vmem:[#allocation13 + $0xf8] sm:$0xff]
    %537 = vmatprep.subr.mxu0 %v506
    %538 = vmatpush1.msra.mxu0 %v505
    %539 = vmatprep.subr.mxu0 %v508
    %540 = vmatpush1.msra.mxu0 %v507
    %541 = vmatprep.subr.mxu0 %v510
    %542 = vmatpush1.msra.mxu0 %v509
    %543 = vmatprep.subr.mxu0 %v512
    %544 = vmatpush1.msra.mxu0 %v511
    %545 = vmatprep.subr.mxu0 %v514
    %546 = vmatpush1.msra.mxu0 %v513
    %547 = vmatprep.subr.mxu0 %v516
    %548 = vmatpush1.msra.mxu0 %v515
    %549 = vmatprep.subr.mxu0 %v518
    %550 = vmatpush1.msra.mxu0 %v517
    %551 = vmatprep.subr.mxu0 %v520
    %552 = vmatpush1.msra.mxu0 %v519
    %553 = vmatprep.subr.mxu0 %v522
    %554 = vmatpush1.msra.mxu0 %v521
    %555 = vmatprep.subr.mxu0 %v524
    %556 = vmatpush1.msra.mxu0 %v523
    %557 = vmatprep.subr.mxu0 %v526
    %558 = vmatpush1.msra.mxu0 %v525
    %559 = vmatprep.subr.mxu0 %v528
    %560 = vmatpush1.msra.mxu0 %v527
    %561 = vmatprep.subr.mxu0 %v530
    %562 = vmatpush1.msra.mxu0 %v529
    %563 = vmatprep.subr.mxu0 %v532
    %564 = vmatpush1.msra.mxu0 %v531
    %565 = vmatprep.subr.mxu0 %v534
    %566 = vmatpush1.msra.mxu0 %v533
    %567 = vmatprep.subr.mxu0 %v536
    %568 = vmatpush1.msra.mxu0 %v535
    %569 = vmatprep.subr.mxu0 0.0
    %570 = vmatpush1.msra.mxu0 0.0
    %571 = vmatprep.subr.mxu0 0.0
    %572 = vmatpush1.msra.mxu0 0.0
    %573 = vmatprep.subr.mxu0 0.0
    %574 = vmatpush1.msra.mxu0 0.0
    %575 = vmatprep.subr.mxu0 0.0
    %576 = vmatpush1.msra.mxu0 0.0
    %577 = vmatprep.subr.mxu0 0.0
    %578 = vmatpush1.msra.mxu0 0.0
    %579 = vmatprep.subr.mxu0 0.0
    %580 = vmatpush1.msra.mxu0 0.0
    %581 = vmatprep.subr.mxu0 0.0
    %582 = vmatpush1.msra.mxu0 0.0
    %583 = vmatprep.subr.mxu0 0.0
    %584 = vmatpush1.msra.mxu0 0.0
    %585 = vmatprep.subr.mxu0 0.0
    %586 = vmatpush1.msra.mxu0 0.0
    %587 = vmatprep.subr.mxu0 0.0
    %588 = vmatpush1.msra.mxu0 0.0
    %589 = vmatprep.subr.mxu0 0.0
    %590 = vmatpush1.msra.mxu0 0.0
    %591 = vmatprep.subr.mxu0 0.0
    %592 = vmatpush1.msra.mxu0 0.0
    %593 = vmatprep.subr.mxu0 0.0
    %594 = vmatpush1.msra.mxu0 0.0
    %595 = vmatprep.subr.mxu0 0.0
    %596 = vmatpush1.msra.mxu0 0.0
    %597 = vmatprep.subr.mxu0 0.0
    %598 = vmatpush1.msra.mxu0 0.0
    %599 = vmatprep.subr.mxu0 0.0
    %600 = vmatpush1.msra.mxu0 0.0
    %601 = vmatprep.mubr.f32.mxu0 0.0
    %602 = vmatmul.mubr.f32.gmra.mrb[0].mxu0 %v377
    %v603 = vpop.f32.mrb[0].mxu0
    %v604 = vadd.f32 0.0, %v603
    %v605 = vpop.f32.mrb[0].mxu0
    %v606 = vadd.f32 0.0, %v605
    %607 = vmatprep.mubr.f32.mxu0 0.0
    %608 = vmatmul.mubr.f32.gmra.mrb[0].mxu0 %v382
    %v609 = vpop.f32.mrb[0].mxu0
    %v610 = vadd.f32 0.0, %v609
    %v611 = vpop.f32.mrb[0].mxu0
    %v612 = vadd.f32 0.0, %v611
    %613 = vdwg.mxu0
    %v614 = vld [vmem:[%s10] sm:$0x1]
    %v616 = vlaneseq
    %v617 = vshrl.u32 %v616, 7
    %v618 = vsub.s32 0, %v617
    %v619 = vrot.slane %v614, %v618
    %vm621 = vcmask 326656
    %v623 = vsel %vm621, %v385, 0
    %v626 = vsel %vm621, %v386, 0
    %v629 = vsel %vm621, %v387, 0
    %631 = vmatprep.subr.mxu0 0.0
    %632 = vmatpush1.msra.mxu0 %v489
    %633 = vmatprep.subr.mxu0 0.0
    %634 = vmatpush1.msra.mxu0 %v495
    %635 = vmatprep.subr.mxu0 0.0
    %636 = vmatpush1.msra.mxu0 %v501
    %637 = vmatprep.subr.mxu0 0.0
    %638 = vmatpush1.msra.mxu0 %v604
    %639 = vmatprep.subr.mxu0 0.0
    %640 = vmatpush1.msra.mxu0 %v610
    %641 = vmatprep.subr.mxu0 0.0
    %642 = vmatpush1.msra.mxu0 0.0
    %643 = vmatprep.subr.mxu0 0.0
    %644 = vmatpush1.msra.mxu0 0.0
    %645 = vmatprep.subr.mxu0 0.0
    %646 = vmatpush1.msra.mxu0 0.0
    %647 = vmatprep.subr.mxu0 0.0
    %648 = vmatpush1.msra.mxu0 0.0
    %649 = vmatprep.subr.mxu0 0.0
    %650 = vmatpush1.msra.mxu0 0.0
    %651 = vmatprep.subr.mxu0 0.0
    %652 = vmatpush1.msra.mxu0 0.0
    %653 = vmatprep.subr.mxu0 0.0
    %654 = vmatpush1.msra.mxu0 0.0
    %655 = vmatprep.subr.mxu0 0.0
    %656 = vmatpush1.msra.mxu0 0.0
    %657 = vmatprep.subr.mxu0 0.0
    %658 = vmatpush1.msra.mxu0 0.0
    %659 = vmatprep.subr.mxu0 0.0
    %660 = vmatpush1.msra.mxu0 0.0
    %661 = vmatprep.subr.mxu0 0.0
    %662 = vmatpush1.msra.mxu0 0.0
    %663 = vmatprep.subr.mxu0 0.0
    %664 = vmatpush1.msra.mxu0 0.0
    %665 = vmatprep.subr.mxu0 0.0
    %666 = vmatpush1.msra.mxu0 0.0
    %667 = vmatprep.subr.mxu0 0.0
    %668 = vmatpush1.msra.mxu0 0.0
    %669 = vmatprep.subr.mxu0 0.0
    %670 = vmatpush1.msra.mxu0 0.0
    %671 = vmatprep.subr.mxu0 0.0
    %672 = vmatpush1.msra.mxu0 0.0
    %673 = vmatprep.subr.mxu0 0.0
    %674 = vmatpush1.msra.mxu0 0.0
    %675 = vmatprep.subr.mxu0 0.0
    %676 = vmatpush1.msra.mxu0 0.0
    %677 = vmatprep.subr.mxu0 0.0
    %678 = vmatpush1.msra.mxu0 0.0
    %679 = vmatprep.subr.mxu0 0.0
    %680 = vmatpush1.msra.mxu0 0.0
    %681 = vmatprep.subr.mxu0 0.0
    %682 = vmatpush1.msra.mxu0 0.0
    %683 = vmatprep.subr.mxu0 0.0
    %684 = vmatpush1.msra.mxu0 0.0
    %685 = vmatprep.subr.mxu0 0.0
    %686 = vmatpush1.msra.mxu0 0.0
    %687 = vmatprep.subr.mxu0 0.0
    %688 = vmatpush1.msra.mxu0 0.0
    %689 = vmatprep.subr.mxu0 0.0
    %690 = vmatpush1.msra.mxu0 0.0
    %691 = vmatprep.subr.mxu0 0.0
    %692 = vmatpush1.msra.mxu0 0.0
    %693 = vmatprep.subr.mxu0 0.0
    %694 = vmatpush1.msra.mxu0 0.0
    %695 = vmatprep.mubr.f32.mxu0 0.0
    %696 = vmatmul.mubr.f32.gmra.mrb[0].mxu0 %v623
    %v697 = vpop.f32.mrb[0].mxu0
    %v698 = vadd.f32 %v619, %v697
    %v699 = vpop.f32.mrb[0].mxu0
    %700 = vmatprep.mubr.f32.mxu0 0.0
    %701 = vmatmul.mubr.f32.gmra.mrb[0].mxu0 %v626
    %v702 = vpop.f32.mrb[0].mxu0
    %v703 = vadd.f32 %v619, %v702
    %v704 = vpop.f32.mrb[0].mxu0
    %705 = vmatprep.mubr.f32.mxu0 0.0
    %706 = vmatmul.mubr.f32.gmra.mrb[0].mxu0 %v629
    %v707 = vpop.f32.mrb[0].mxu0
    %v708 = vadd.f32 %v619, %v707
    %v709 = vpop.f32.mrb[0].mxu0
    %710 = vdwg.mxu0
    %v711 = vld [vmem:[%s11] sm:$0x1]
    %v713 = vlaneseq
    %v714 = vshrl.u32 %v713, 7
    %v715 = vsub.s32 0, %v714
    %v716 = vrot.slane %v711, %v715
    %v719 = vsel %vm621, %v388, 0
    %v722 = vsel %vm621, %v389, 0
    %724 = vmatprep.subr.mxu0 0.0
    %725 = vmatpush1.msra.mxu0 %v491
    %726 = vmatprep.subr.mxu0 0.0
    %727 = vmatpush1.msra.mxu0 %v497
    %728 = vmatprep.subr.mxu0 0.0
    %729 = vmatpush1.msra.mxu0 %v503
    %730 = vmatprep.subr.mxu0 0.0
    %731 = vmatpush1.msra.mxu0 %v606
    %732 = vmatprep.subr.mxu0 0.0
    %733 = vmatpush1.msra.mxu0 %v612
    %734 = vmatprep.subr.mxu0 0.0
    %735 = vmatpush1.msra.mxu0 0.0
    %736 = vmatprep.subr.mxu0 0.0
    %737 = vmatpush1.msra.mxu0 0.0
    %738 = vmatprep.subr.mxu0 0.0
    %739 = vmatpush1.msra.mxu0 0.0
    %740 = vmatprep.subr.mxu0 0.0
    %741 = vmatpush1.msra.mxu0 0.0
    %742 = vmatprep.subr.mxu0 0.0
    %743 = vmatpush1.msra.mxu0 0.0
    %744 = vmatprep.subr.mxu0 0.0
    %745 = vmatpush1.msra.mxu0 0.0
    %746 = vmatprep.subr.mxu0 0.0
    %747 = vmatpush1.msra.mxu0 0.0
    %748 = vmatprep.subr.mxu0 0.0
    %749 = vmatpush1.msra.mxu0 0.0
    %750 = vmatprep.subr.mxu0 0.0
    %751 = vmatpush1.msra.mxu0 0.0
    %752 = vmatprep.subr.mxu0 0.0
    %753 = vmatpush1.msra.mxu0 0.0
    %754 = vmatprep.subr.mxu0 0.0
    %755 = vmatpush1.msra.mxu0 0.0
    %756 = vmatprep.subr.mxu0 0.0
    %757 = vmatpush1.msra.mxu0 0.0
    %758 = vmatprep.subr.mxu0 0.0
    %759 = vmatpush1.msra.mxu0 0.0
    %760 = vmatprep.subr.mxu0 0.0
    %761 = vmatpush1.msra.mxu0 0.0
    %762 = vmatprep.subr.mxu0 0.0
    %763 = vmatpush1.msra.mxu0 0.0
    %764 = vmatprep.subr.mxu0 0.0
    %765 = vmatpush1.msra.mxu0 0.0
    %766 = vmatprep.subr.mxu0 0.0
    %767 = vmatpush1.msra.mxu0 0.0
    %768 = vmatprep.subr.mxu0 0.0
    %769 = vmatpush1.msra.mxu0 0.0
    %770 = vmatprep.subr.mxu0 0.0
    %771 = vmatpush1.msra.mxu0 0.0
    %772 = vmatprep.subr.mxu0 0.0
    %773 = vmatpush1.msra.mxu0 0.0
    %774 = vmatprep.subr.mxu0 0.0
    %775 = vmatpush1.msra.mxu0 0.0
    %776 = vmatprep.subr.mxu0 0.0
    %777 = vmatpush1.msra.mxu0 0.0
    %778 = vmatprep.subr.mxu0 0.0
    %779 = vmatpush1.msra.mxu0 0.0
    %780 = vmatprep.subr.mxu0 0.0
    %781 = vmatpush1.msra.mxu0 0.0
    %782 = vmatprep.subr.mxu0 0.0
    %783 = vmatpush1.msra.mxu0 0.0
    %784 = vmatprep.subr.mxu0 0.0
    %785 = vmatpush1.msra.mxu0 0.0
    %786 = vmatprep.subr.mxu0 0.0
    %787 = vmatpush1.msra.mxu0 0.0
    %788 = vmatprep.mubr.f32.mxu0 0.0
    %789 = vmatmul.mubr.f32.gmra.mrb[0].mxu0 %v719
    %v790 = vpop.f32.mrb[0].mxu0
    %v791 = vadd.f32 %v716, %v790
    %v792 = vpop.f32.mrb[0].mxu0
    %793 = vmatprep.mubr.f32.mxu0 0.0
    %794 = vmatmul.mubr.f32.gmra.mrb[0].mxu0 %v722
    %v795 = vpop.f32.mrb[0].mxu0
    %v796 = vadd.f32 %v716, %v795
    %v797 = vpop.f32.mrb[0].mxu0
    %798 = vdwg.mxu0
    %v799 = vmax.f32 %v698, 0.0
    %v800 = vmax.f32 %v703, 0.0
    %v801 = vmax.f32 %v708, 0.0
    %v802 = vmax.f32 %v791, 0.0
    %v803 = vmax.f32 %v796, 0.0
    %v804 = vld [vmem:[#allocation14] sm:$0xff]
    %v805 = vld [vmem:[#allocation14 + $0x8] sm:$0xff]
    %v806 = vld [vmem:[#allocation14 + $0x10] sm:$0xff]
    %v807 = vld [vmem:[#allocation14 + $0x18] sm:$0xff]
    %v808 = vld [vmem:[#allocation14 + $0x20] sm:$0xff]
    %v809 = vld [vmem:[#allocation14 + $0x28] sm:$0xff]
    %v810 = vld [vmem:[#allocation14 + $0x30] sm:$0xff]
    %v811 = vld [vmem:[#allocation14 + $0x38] sm:$0xff]
    %v812 = vld [vmem:[#allocation14 + $0x40] sm:$0xff]
    %v813 = vld [vmem:[#allocation14 + $0x48] sm:$0xff]
    %v814 = vld [vmem:[#allocation14 + $0x50] sm:$0xff]
    %v815 = vld [vmem:[#allocation14 + $0x58] sm:$0xff]
    %v816 = vld [vmem:[#allocation14 + $0x60] sm:$0xff]
    %v817 = vld [vmem:[#allocation14 + $0x68] sm:$0xff]
    %v818 = vld [vmem:[#allocation14 + $0x70] sm:$0xff]
    %v819 = vld [vmem:[#allocation14 + $0x78] sm:$0xff]
    %v820 = vld [vmem:[#allocation14 + $0x80] sm:$0xff]
    %v821 = vld [vmem:[#allocation14 + $0x88] sm:$0xff]
    %v822 = vld [vmem:[#allocation14 + $0x90] sm:$0xff]
    %v823 = vld [vmem:[#allocation14 + $0x98] sm:$0xff]
    %v824 = vld [vmem:[#allocation14 + $0xa0] sm:$0xff]
    %v825 = vld [vmem:[#allocation14 + $0xa8] sm:$0xff]
    %v826 = vld [vmem:[#allocation14 + $0xb0] sm:$0xff]
    %v827 = vld [vmem:[#allocation14 + $0xb8] sm:$0xff]
    %v828 = vld [vmem:[#allocation14 + $0xc0] sm:$0xff]
    %v829 = vld [vmem:[#allocation14 + $0xc8] sm:$0xff]
    %v830 = vld [vmem:[#allocation14 + $0xd0] sm:$0xff]
    %v831 = vld [vmem:[#allocation14 + $0xd8] sm:$0xff]
    %v832 = vld [vmem:[#allocation14 + $0xe0] sm:$0xff]
    %v833 = vld [vmem:[#allocation14 + $0xe8] sm:$0xff]
    %v834 = vld [vmem:[#allocation14 + $0xf0] sm:$0xff]
    %v835 = vld [vmem:[#allocation14 + $0xf8] sm:$0xff]
    %836 = vmatprep.subr.mxu0 %v805
    %837 = vmatpush1.msra.mxu0 %v804
    %838 = vmatprep.subr.mxu0 %v807
    %839 = vmatpush1.msra.mxu0 %v806
    %840 = vmatprep.subr.mxu0 %v809
    %841 = vmatpush1.msra.mxu0 %v808
    %842 = vmatprep.subr.mxu0 %v811
    %843 = vmatpush1.msra.mxu0 %v810
    %844 = vmatprep.subr.mxu0 %v813
    %845 = vmatpush1.msra.mxu0 %v812
    %846 = vmatprep.subr.mxu0 %v815
    %847 = vmatpush1.msra.mxu0 %v814
    %848 = vmatprep.subr.mxu0 %v817
    %849 = vmatpush1.msra.mxu0 %v816
    %850 = vmatprep.subr.mxu0 %v819
    %851 = vmatpush1.msra.mxu0 %v818
    %852 = vmatprep.subr.mxu0 %v821
    %853 = vmatpush1.msra.mxu0 %v820
    %854 = vmatprep.subr.mxu0 %v823
    %855 = vmatpush1.msra.mxu0 %v822
    %856 = vmatprep.subr.mxu0 %v825
    %857 = vmatpush1.msra.mxu0 %v824
    %858 = vmatprep.subr.mxu0 %v827
    %859 = vmatpush1.msra.mxu0 %v826
    %860 = vmatprep.subr.mxu0 %v829
    %861 = vmatpush1.msra.mxu0 %v828
    %862 = vmatprep.subr.mxu0 %v831
    %863 = vmatpush1.msra.mxu0 %v830
    %864 = vmatprep.subr.mxu0 %v833
    %865 = vmatpush1.msra.mxu0 %v832
    %866 = vmatprep.subr.mxu0 %v835
    %867 = vmatpush1.msra.mxu0 %v834
    %868 = vmatprep.subr.mxu0 0.0
    %869 = vmatpush1.msra.mxu0 0.0
    %870 = vmatprep.subr.mxu0 0.0
    %871 = vmatpush1.msra.mxu0 0.0
    %872 = vmatprep.subr.mxu0 0.0
    %873 = vmatpush1.msra.mxu0 0.0
    %874 = vmatprep.subr.mxu0 0.0
    %875 = vmatpush1.msra.mxu0 0.0
    %876 = vmatprep.subr.mxu0 0.0
    %877 = vmatpush1.msra.mxu0 0.0
    %878 = vmatprep.subr.mxu0 0.0
    %879 = vmatpush1.msra.mxu0 0.0
    %880 = vmatprep.subr.mxu0 0.0
    %881 = vmatpush1.msra.mxu0 0.0
    %882 = vmatprep.subr.mxu0 0.0
    %883 = vmatpush1.msra.mxu0 0.0
    %884 = vmatprep.subr.mxu0 0.0
    %885 = vmatpush1.msra.mxu0 0.0
    %886 = vmatprep.subr.mxu0 0.0
    %887 = vmatpush1.msra.mxu0 0.0
    %888 = vmatprep.subr.mxu0 0.0
    %889 = vmatpush1.msra.mxu0 0.0
    %890 = vmatprep.subr.mxu0 0.0
    %891 = vmatpush1.msra.mxu0 0.0
    %892 = vmatprep.subr.mxu0 0.0
    %893 = vmatpush1.msra.mxu0 0.0
    %894 = vmatprep.subr.mxu0 0.0
    %895 = vmatpush1.msra.mxu0 0.0
    %896 = vmatprep.subr.mxu0 0.0
    %897 = vmatpush1.msra.mxu0 0.0
    %898 = vmatprep.subr.mxu0 0.0
    %899 = vmatpush1.msra.mxu0 0.0
    %900 = vmatprep.mubr.f32.mxu0 0.0
    %901 = vmatmul.mubr.f32.gmra.mrb[0].mxu0 %v799
    %v902 = vpop.f32.mrb[0].mxu0
    %v903 = vadd.f32 0.0, %v902
    %v904 = vpop.f32.mrb[0].mxu0
    %v905 = vadd.f32 0.0, %v904
    %906 = vmatprep.mubr.f32.mxu0 0.0
    %907 = vmatmul.mubr.f32.gmra.mrb[0].mxu0 %v800
    %v908 = vpop.f32.mrb[0].mxu0
    %v909 = vadd.f32 0.0, %v908
    %v910 = vpop.f32.mrb[0].mxu0
    %v911 = vadd.f32 0.0, %v910
    %912 = vmatprep.mubr.f32.mxu0 0.0
    %913 = vmatmul.mubr.f32.gmra.mrb[0].mxu0 %v801
    %v914 = vpop.f32.mrb[0].mxu0
    %v915 = vadd.f32 0.0, %v914
    %v916 = vpop.f32.mrb[0].mxu0
    %v917 = vadd.f32 0.0, %v916
    %918 = vdwg.mxu0
    %v919 = vld [vmem:[#allocation16] sm:$0xff]
    %v920 = vld [vmem:[#allocation16 + $0x8] sm:$0xff]
    %v921 = vld [vmem:[#allocation16 + $0x10] sm:$0xff]
    %v922 = vld [vmem:[#allocation16 + $0x18] sm:$0xff]
    %v923 = vld [vmem:[#allocation16 + $0x20] sm:$0xff]
    %v924 = vld [vmem:[#allocation16 + $0x28] sm:$0xff]
    %v925 = vld [vmem:[#allocation16 + $0x30] sm:$0xff]
    %v926 = vld [vmem:[#allocation16 + $0x38] sm:$0xff]
    %v927 = vld [vmem:[#allocation16 + $0x40] sm:$0xff]
    %v928 = vld [vmem:[#allocation16 + $0x48] sm:$0xff]
    %v929 = vld [vmem:[#allocation16 + $0x50] sm:$0xff]
    %v930 = vld [vmem:[#allocation16 + $0x58] sm:$0xff]
    %v931 = vld [vmem:[#allocation16 + $0x60] sm:$0xff]
    %v932 = vld [vmem:[#allocation16 + $0x68] sm:$0xff]
    %v933 = vld [vmem:[#allocation16 + $0x70] sm:$0xff]
    %v934 = vld [vmem:[#allocation16 + $0x78] sm:$0xff]
    %v935 = vld [vmem:[#allocation16 + $0x80] sm:$0xff]
    %v936 = vld [vmem:[#allocation16 + $0x88] sm:$0xff]
    %v937 = vld [vmem:[#allocation16 + $0x90] sm:$0xff]
    %v938 = vld [vmem:[#allocation16 + $0x98] sm:$0xff]
    %v939 = vld [vmem:[#allocation16 + $0xa0] sm:$0xff]
    %v940 = vld [vmem:[#allocation16 + $0xa8] sm:$0xff]
    %v941 = vld [vmem:[#allocation16 + $0xb0] sm:$0xff]
    %v942 = vld [vmem:[#allocation16 + $0xb8] sm:$0xff]
    %v943 = vld [vmem:[#allocation16 + $0xc0] sm:$0xff]
    %v944 = vld [vmem:[#allocation16 + $0xc8] sm:$0xff]
    %v945 = vld [vmem:[#allocation16 + $0xd0] sm:$0xff]
    %v946 = vld [vmem:[#allocation16 + $0xd8] sm:$0xff]
    %v947 = vld [vmem:[#allocation16 + $0xe0] sm:$0xff]
    %v948 = vld [vmem:[#allocation16 + $0xe8] sm:$0xff]
    %v949 = vld [vmem:[#allocation16 + $0xf0] sm:$0xff]
    %v950 = vld [vmem:[#allocation16 + $0xf8] sm:$0xff]
    %951 = vmatprep.subr.mxu0 %v920
    %952 = vmatpush1.msra.mxu0 %v919
    %953 = vmatprep.subr.mxu0 %v922
    %954 = vmatpush1.msra.mxu0 %v921
    %955 = vmatprep.subr.mxu0 %v924
    %956 = vmatpush1.msra.mxu0 %v923
    %957 = vmatprep.subr.mxu0 %v926
    %958 = vmatpush1.msra.mxu0 %v925
    %959 = vmatprep.subr.mxu0 %v928
    %960 = vmatpush1.msra.mxu0 %v927
    %961 = vmatprep.subr.mxu0 %v930
    %962 = vmatpush1.msra.mxu0 %v929
    %963 = vmatprep.subr.mxu0 %v932
    %964 = vmatpush1.msra.mxu0 %v931
    %965 = vmatprep.subr.mxu0 %v934
    %966 = vmatpush1.msra.mxu0 %v933
    %967 = vmatprep.subr.mxu0 %v936
    %968 = vmatpush1.msra.mxu0 %v935
    %969 = vmatprep.subr.mxu0 %v938
    %970 = vmatpush1.msra.mxu0 %v937
    %971 = vmatprep.subr.mxu0 %v940
    %972 = vmatpush1.msra.mxu0 %v939
    %973 = vmatprep.subr.mxu0 %v942
    %974 = vmatpush1.msra.mxu0 %v941
    %975 = vmatprep.subr.mxu0 %v944
    %976 = vmatpush1.msra.mxu0 %v943
    %977 = vmatprep.subr.mxu0 %v946
    %978 = vmatpush1.msra.mxu0 %v945
    %979 = vmatprep.subr.mxu0 %v948
    %980 = vmatpush1.msra.mxu0 %v947
    %981 = vmatprep.subr.mxu0 %v950
    %982 = vmatpush1.msra.mxu0 %v949
    %983 = vmatprep.subr.mxu0 0.0
    %984 = vmatpush1.msra.mxu0 0.0
    %985 = vmatprep.subr.mxu0 0.0
    %986 = vmatpush1.msra.mxu0 0.0
    %987 = vmatprep.subr.mxu0 0.0
    %988 = vmatpush1.msra.mxu0 0.0
    %989 = vmatprep.subr.mxu0 0.0
    %990 = vmatpush1.msra.mxu0 0.0
    %991 = vmatprep.subr.mxu0 0.0
    %992 = vmatpush1.msra.mxu0 0.0
    %993 = vmatprep.subr.mxu0 0.0
    %994 = vmatpush1.msra.mxu0 0.0
    %995 = vmatprep.subr.mxu0 0.0
    %996 = vmatpush1.msra.mxu0 0.0
    %997 = vmatprep.subr.mxu0 0.0
    %998 = vmatpush1.msra.mxu0 0.0
    %999 = vmatprep.subr.mxu0 0.0
    %1000 = vmatpush1.msra.mxu0 0.0
    %1001 = vmatprep.subr.mxu0 0.0
    %1002 = vmatpush1.msra.mxu0 0.0
    %1003 = vmatprep.subr.mxu0 0.0
    %1004 = vmatpush1.msra.mxu0 0.0
    %1005 = vmatprep.subr.mxu0 0.0
    %1006 = vmatpush1.msra.mxu0 0.0
    %1007 = vmatprep.subr.mxu0 0.0
    %1008 = vmatpush1.msra.mxu0 0.0
    %1009 = vmatprep.subr.mxu0 0.0
    %1010 = vmatpush1.msra.mxu0 0.0
    %1011 = vmatprep.subr.mxu0 0.0
    %1012 = vmatpush1.msra.mxu0 0.0
    %1013 = vmatprep.subr.mxu0 0.0
    %1014 = vmatpush1.msra.mxu0 0.0
    %1015 = vmatprep.mubr.f32.mxu0 0.0
    %1016 = vmatmul.mubr.f32.gmra.mrb[0].mxu0 %v802
    %v1017 = vpop.f32.mrb[0].mxu0
    %v1018 = vadd.f32 0.0, %v1017
    %v1019 = vpop.f32.mrb[0].mxu0
    %v1020 = vadd.f32 0.0, %v1019
    %1021 = vmatprep.mubr.f32.mxu0 0.0
    %1022 = vmatmul.mubr.f32.gmra.mrb[0].mxu0 %v803
    %v1023 = vpop.f32.mrb[0].mxu0
    %v1024 = vadd.f32 0.0, %v1023
    %v1025 = vpop.f32.mrb[0].mxu0
    %v1026 = vadd.f32 0.0, %v1025
    %1027 = vdwg.mxu0
    %v1028 = vld [vmem:[%s14] sm:$0x1]
    %v1030 = vlaneseq
    %v1031 = vshrl.u32 %v1030, 7
    %v1032 = vsub.s32 0, %v1031
    %v1033 = vrot.slane %v1028, %v1032
    %1035 = vmatprep.subr.mxu0 0.0
    %1036 = vmatpush1.msra.mxu0 %v903
    %1037 = vmatprep.subr.mxu0 0.0
    %1038 = vmatpush1.msra.mxu0 %v909
    %1039 = vmatprep.subr.mxu0 0.0
    %1040 = vmatpush1.msra.mxu0 %v915
    %1041 = vmatprep.subr.mxu0 0.0
    %1042 = vmatpush1.msra.mxu0 %v1018
    %1043 = vmatprep.subr.mxu0 0.0
    %1044 = vmatpush1.msra.mxu0 %v1024
    %1045 = vmatprep.subr.mxu0 0.0
    %1046 = vmatpush1.msra.mxu0 0.0
    %1047 = vmatprep.subr.mxu0 0.0
    %1048 = vmatpush1.msra.mxu0 0.0
    %1049 = vmatprep.subr.mxu0 0.0
    %1050 = vmatpush1.msra.mxu0 0.0
    %1051 = vmatprep.subr.mxu0 0.0
    %1052 = vmatpush1.msra.mxu0 0.0
    %1053 = vmatprep.subr.mxu0 0.0
    %1054 = vmatpush1.msra.mxu0 0.0
    %1055 = vmatprep.subr.mxu0 0.0
    %1056 = vmatpush1.msra.mxu0 0.0
    %1057 = vmatprep.subr.mxu0 0.0
    %1058 = vmatpush1.msra.mxu0 0.0
    %1059 = vmatprep.subr.mxu0 0.0
    %1060 = vmatpush1.msra.mxu0 0.0
    %1061 = vmatprep.subr.mxu0 0.0
    %1062 = vmatpush1.msra.mxu0 0.0
    %1063 = vmatprep.subr.mxu0 0.0
    %1064 = vmatpush1.msra.mxu0 0.0
    %1065 = vmatprep.subr.mxu0 0.0
    %1066 = vmatpush1.msra.mxu0 0.0
    %1067 = vmatprep.subr.mxu0 0.0
    %1068 = vmatpush1.msra.mxu0 0.0
    %1069 = vmatprep.subr.mxu0 0.0
    %1070 = vmatpush1.msra.mxu0 0.0
    %1071 = vmatprep.subr.mxu0 0.0
    %1072 = vmatpush1.msra.mxu0 0.0
    %1073 = vmatprep.subr.mxu0 0.0
    %1074 = vmatpush1.msra.mxu0 0.0
    %1075 = vmatprep.subr.mxu0 0.0
    %1076 = vmatpush1.msra.mxu0 0.0
    %1077 = vmatprep.subr.mxu0 0.0
    %1078 = vmatpush1.msra.mxu0 0.0
    %1079 = vmatprep.subr.mxu0 0.0
    %1080 = vmatpush1.msra.mxu0 0.0
    %1081 = vmatprep.subr.mxu0 0.0
    %1082 = vmatpush1.msra.mxu0 0.0
    %1083 = vmatprep.subr.mxu0 0.0
    %1084 = vmatpush1.msra.mxu0 0.0
    %1085 = vmatprep.subr.mxu0 0.0
    %1086 = vmatpush1.msra.mxu0 0.0
    %1087 = vmatprep.subr.mxu0 0.0
    %1088 = vmatpush1.msra.mxu0 0.0
    %1089 = vmatprep.subr.mxu0 0.0
    %1090 = vmatpush1.msra.mxu0 0.0
    %1091 = vmatprep.subr.mxu0 0.0
    %1092 = vmatpush1.msra.mxu0 0.0
    %1093 = vmatprep.subr.mxu0 0.0
    %1094 = vmatpush1.msra.mxu0 0.0
    %1095 = vmatprep.subr.mxu0 0.0
    %1096 = vmatpush1.msra.mxu0 0.0
    %1097 = vmatprep.subr.mxu0 0.0
    %1098 = vmatpush1.msra.mxu0 0.0
    %1099 = vmatprep.mubr.f32.mxu0 0.0
    %1100 = vmatmul.mubr.f32.gmra.mrb[0].mxu0 %v623
    %v1101 = vpop.f32.mrb[0].mxu0
    %v1102 = vadd.f32 %v1033, %v1101
    %v1103 = vpop.f32.mrb[0].mxu0
    %1104 = vmatprep.mubr.f32.mxu0 0.0
    %1105 = vmatmul.mubr.f32.gmra.mrb[0].mxu0 %v626
    %v1106 = vpop.f32.mrb[0].mxu0
    %v1107 = vadd.f32 %v1033, %v1106
    %v1108 = vpop.f32.mrb[0].mxu0
    %1109 = vmatprep.mubr.f32.mxu0 0.0
    %1110 = vmatmul.mubr.f32.gmra.mrb[0].mxu0 %v629
    %v1111 = vpop.f32.mrb[0].mxu0
    %v1112 = vadd.f32 %v1033, %v1111
    %v1113 = vpop.f32.mrb[0].mxu0
    %1114 = vdwg.mxu0
    %v1115 = vld [vmem:[%s15] sm:$0x1]
    %v1117 = vlaneseq
    %v1118 = vshrl.u32 %v1117, 7
    %v1119 = vsub.s32 0, %v1118
    %v1120 = vrot.slane %v1115, %v1119
    %1122 = vmatprep.subr.mxu0 0.0
    %1123 = vmatpush1.msra.mxu0 %v905
    %1124 = vmatprep.subr.mxu0 0.0
    %1125 = vmatpush1.msra.mxu0 %v911
    %1126 = vmatprep.subr.mxu0 0.0
    %1127 = vmatpush1.msra.mxu0 %v917
    %1128 = vmatprep.subr.mxu0 0.0
    %1129 = vmatpush1.msra.mxu0 %v1020
    %1130 = vmatprep.subr.mxu0 0.0
    %1131 = vmatpush1.msra.mxu0 %v1026
    %1132 = vmatprep.subr.mxu0 0.0
    %1133 = vmatpush1.msra.mxu0 0.0
    %1134 = vmatprep.subr.mxu0 0.0
    %1135 = vmatpush1.msra.mxu0 0.0
    %1136 = vmatprep.subr.mxu0 0.0
    %1137 = vmatpush1.msra.mxu0 0.0
    %1138 = vmatprep.subr.mxu0 0.0
    %1139 = vmatpush1.msra.mxu0 0.0
    %1140 = vmatprep.subr.mxu0 0.0
    %1141 = vmatpush1.msra.mxu0 0.0
    %1142 = vmatprep.subr.mxu0 0.0
    %1143 = vmatpush1.msra.mxu0 0.0
    %1144 = vmatprep.subr.mxu0 0.0
    %1145 = vmatpush1.msra.mxu0 0.0
    %1146 = vmatprep.subr.mxu0 0.0
    %1147 = vmatpush1.msra.mxu0 0.0
    %1148 = vmatprep.subr.mxu0 0.0
    %1149 = vmatpush1.msra.mxu0 0.0
    %1150 = vmatprep.subr.mxu0 0.0
    %1151 = vmatpush1.msra.mxu0 0.0
    %1152 = vmatprep.subr.mxu0 0.0
    %1153 = vmatpush1.msra.mxu0 0.0
    %1154 = vmatprep.subr.mxu0 0.0
    %1155 = vmatpush1.msra.mxu0 0.0
    %1156 = vmatprep.subr.mxu0 0.0
    %1157 = vmatpush1.msra.mxu0 0.0
    %1158 = vmatprep.subr.mxu0 0.0
    %1159 = vmatpush1.msra.mxu0 0.0
    %1160 = vmatprep.subr.mxu0 0.0
    %1161 = vmatpush1.msra.mxu0 0.0
    %1162 = vmatprep.subr.mxu0 0.0
    %1163 = vmatpush1.msra.mxu0 0.0
    %1164 = vmatprep.subr.mxu0 0.0
    %1165 = vmatpush1.msra.mxu0 0.0
    %1166 = vmatprep.subr.mxu0 0.0
    %1167 = vmatpush1.msra.mxu0 0.0
    %1168 = vmatprep.subr.mxu0 0.0
    %1169 = vmatpush1.msra.mxu0 0.0
    %1170 = vmatprep.subr.mxu0 0.0
    %1171 = vmatpush1.msra.mxu0 0.0
    %1172 = vmatprep.subr.mxu0 0.0
    %1173 = vmatpush1.msra.mxu0 0.0
    %1174 = vmatprep.subr.mxu0 0.0
    %1175 = vmatpush1.msra.mxu0 0.0
    %1176 = vmatprep.subr.mxu0 0.0
    %1177 = vmatpush1.msra.mxu0 0.0
    %1178 = vmatprep.subr.mxu0 0.0
    %1179 = vmatpush1.msra.mxu0 0.0
    %1180 = vmatprep.subr.mxu0 0.0
    %1181 = vmatpush1.msra.mxu0 0.0
    %1182 = vmatprep.subr.mxu0 0.0
    %1183 = vmatpush1.msra.mxu0 0.0
    %1184 = vmatprep.subr.mxu0 0.0
    %1185 = vmatpush1.msra.mxu0 0.0
    %1186 = vmatprep.mubr.f32.mxu0 0.0
    %1187 = vmatmul.mubr.f32.gmra.mrb[0].mxu0 %v719
    %v1188 = vpop.f32.mrb[0].mxu0
    %v1189 = vadd.f32 %v1120, %v1188
    %v1190 = vpop.f32.mrb[0].mxu0
    %1191 = vmatprep.mubr.f32.mxu0 0.0
    %1192 = vmatmul.mubr.f32.gmra.mrb[0].mxu0 %v722
    %v1193 = vpop.f32.mrb[0].mxu0
    %v1194 = vadd.f32 %v1120, %v1193
    %v1195 = vpop.f32.mrb[0].mxu0
    %1196 = vdwg.mxu0
    %1197 = vst [vmem:[#allocation17] sm:$0xff] %v1102
    %1198 = vst [vmem:[#allocation17 + $0x8] sm:$0xff] %v1107
    %1199 = vst [vmem:[#allocation17 + $0x10] sm:$0xff] %v1112
    %1200 = vst [vmem:[#allocation18] sm:$0xff] %v1189
    %1201 = vst [vmem:[#allocation18 + $0x8] sm:$0xff] %v1194
    // Predicated region
    $region102: #{tpu_custom_call.1} parent=1 // pred_check
      _
    $region103: #{tpu_custom_call.1} parent=1 // pred_check_branch
      %1203 = sbr.rel (0) target = $region105
    $region104: #{tpu_custom_call.1} parent=1 // pred_region
      %s1205 = ssub.s32 384, 384
      %1206 = vsyncadd [#allocation4], %s1205
      %s1207 = sshll.u32 [#allocation17], 4
      %s1208 = int_to_ptr.vmem [resolvable:$true] %s1207
      %1213 = dma.vmem_to_hbm [thread:$0]  %s1208, 384, %s16, [#allocation4], 128, 128, 8
    $region105: #{tpu_custom_call.1} parent=1 // pred_fallthru
      _
    // Predicated region
    $region106: #{tpu_custom_call.1} parent=1 // pred_check
      _
    $region107: #{tpu_custom_call.1} parent=1 // pred_check_branch
      %1215 = sbr.rel (0) target = $region109
    $region108: #{tpu_custom_call.1} parent=1 // pred_region
      %s1217 = ssub.s32 256, 256
      %1218 = vsyncadd [#allocation19], %s1217
      %s1219 = sshll.u32 [#allocation18], 4
      %s1220 = int_to_ptr.vmem [resolvable:$true] %s1219
      %1225 = dma.vmem_to_hbm [thread:$0]  %s1220, 256, %s17, [#allocation19], 128, 128, 8
    $region109: #{tpu_custom_call.1} parent=1 // pred_fallthru
      _
    // Predicated region
    $region110: #{tpu_custom_call.1} parent=1 // pred_check
      _
    $region111: #{tpu_custom_call.1} parent=1 // pred_check_branch
      %1227 = sbr.rel (0) target = $region113
    $region112: #{tpu_custom_call.1} parent=1 // pred_region
      %1228 = dma.done [#allocation4], 384
    $region113: #{tpu_custom_call.1} parent=1 // pred_fallthru
      _
    // Predicated region
    $region114: #{tpu_custom_call.1} parent=1 // pred_check
      _
    $region115: #{tpu_custom_call.1} parent=1 // pred_check_branch
      %1230 = sbr.rel (0) target = $region117
    $region116: #{tpu_custom_call.1} parent=1 // pred_region
      %1231 = dma.done [#allocation19], 256
    $region117: #{tpu_custom_call.1} parent=1 // pred_fallthru
      _
    %1232 = vsyncpa [#allocation3], 1
    %1233 = vsyncpa [#allocation6], 1
    %1234 = vsyncpa [#allocation9], 1
    %1235 = vsyncpa [#allocation12], 1
    %1236 = vsyncpa [#allocation15], 1
    %1237 = vsyncpa [#allocation4], 1
    %1238 = vsyncpa [#allocation19], 1

</llo_original>
